<compile_context>
chip_gen: v7x
topology: tpu7x:2x2x1
jax: 0.10.0
libtpu: 0.0.40
codegen_flags: <defaults>
</compile_context>

<pallas_src>
import jax
import jax.numpy as jnp
from jax import lax
from jax.experimental import pallas as pl
from jax.experimental.pallas import tpu as pltpu

H = 100          # true hidden size (module default hidden_layer_size=100)
HP = 128         # lane-padded hidden size per gate
INPUT_SIZE = 1
OUTPUT_SIZE = 1
SLAB = 8         # timesteps per aligned xproj slab (sublane count)
MAX_CHUNK = 1024  # timesteps per streamed grid chunk (2 MiB f32 per buffer)


def _sigmoid_tanh(z):
    # sigmoid(z) == 0.5 * (tanh(z/2) + 1)  (used by the matched reference)
    return 0.5 * (jnp.tanh(0.5 * z) + 1.0)


def _make_lstm_kernel(chunk, seq_len, needs_mask):
    nblocks = chunk // SLAB

    def kernel(xproj_ref, w_hh_ref, w_lin_ref, b_lin_ref, out_ref,
               h_ref, c_ref):
        # ---- init persistent h/c state on the first chunk ----
        @pl.when(pl.program_id(0) == 0)
        def _():
            h_ref[...] = jnp.zeros_like(h_ref)
            c_ref[...] = jnp.zeros_like(c_ref)

        chunk_off = pl.program_id(0) * chunk

        # ---- serial recurrence over this chunk, 8-step aligned slabs ----
        def block(b, carry):
            h, c = carry
            base = pl.multiple_of(b * SLAB, SLAB)
            slab = xproj_ref[pl.ds(base, SLAB), :]          # (8, 4*HP) f32
            for j in range(SLAB):                           # fully unrolled
                # i/f/o columns of W_hh / xproj are pre-scaled by 0.5, so one
                # tanh covers all four gates.
                z = slab[j:j + 1, :] + jnp.dot(
                    h.astype(jnp.bfloat16), w_hh_ref[...],
                    preferred_element_type=jnp.float32)     # (1, 4*HP) f32
                t = jnp.tanh(z)
                ifo = 0.5 * t[:, :3 * HP] + 0.5             # sigmoid(i,f,o)
                i_g = ifo[:, 0 * HP:1 * HP]
                f_g = ifo[:, 1 * HP:2 * HP]
                o_g = ifo[:, 2 * HP:3 * HP]
                g = t[:, 3 * HP:]                           # tanh(g)
                c_new = f_g * c + i_g * g
                h_new = o_g * jnp.tanh(c_new)
                if needs_mask:
                    valid = (chunk_off + base + j) < seq_len
                    h = jnp.where(valid, h_new, h)
                    c = jnp.where(valid, c_new, c)
                else:
                    h, c = h_new, c_new
            return h, c

        h, c = lax.fori_loop(0, nblocks, block, (h_ref[...], c_ref[...]),
                             unroll=False)
        h_ref[...] = h
        c_ref[...] = c

        # ---- final linear layer on the last hidden state -> predictions[-1]
        @pl.when(pl.program_id(0) == pl.num_programs(0) - 1)
        def _():
            out_ref[...] = (jnp.dot(h, w_lin_ref[...],
                                    preferred_element_type=jnp.float32)
                            + b_lin_ref[...])

    return kernel


def _reorder_pad_gates(w):
    """(4*H, ...) stacked [i, f, g, o] (PyTorch order) ->
       (4*HP, ...) stacked [i, f, o, g], zero-padded per gate along the H dim."""
    w4 = w.reshape((4, H) + w.shape[1:])
    w4 = w4[jnp.array([0, 1, 3, 2])]                        # [i, f, o, g]
    pad = [(0, 0)] * w4.ndim
    pad[1] = (0, HP - H)
    w4 = jnp.pad(w4, pad)
    return w4.reshape((4 * HP,) + w.shape[1:])


def _scale_ifo(w):
    """Fold the 0.5 sigmoid pre-scale into the i/f/o gate rows (first 3*HP)."""
    scale = jnp.concatenate([jnp.full((3 * HP,), 0.5, jnp.float32),
                             jnp.ones((HP,), jnp.float32)])
    return w * scale.reshape((4 * HP,) + (1,) * (w.ndim - 1))


def lstm_forward(x, params):
    W_ih, W_hh, b_ih, b_hh, W_lin, b_lin = params

    # pad per-gate to HP lanes (zero padding keeps padded lanes inert) and
    # fold the 0.5 pre-scale into i/f/o (exact for the bf16 weights: power of 2)
    W_ih_p = _scale_ifo(_reorder_pad_gates(W_ih))           # (4*HP, 1)
    W_hh_p = _scale_ifo(_reorder_pad_gates(W_hh))           # (4*HP, H)
    W_hh_p = jnp.pad(W_hh_p, ((0, 0), (0, HP - H)))         # (4*HP, HP)
    b_p = _scale_ifo(_reorder_pad_gates(b_ih + b_hh))       # (4*HP,)
    W_lin_p = jnp.pad(W_lin, ((0, 0), (0, HP - H)))         # (1, HP)

    w_ih_row = W_ih_p.reshape(1, 4 * HP).astype(jnp.float32)
    w_hh_t = W_hh_p.T.astype(jnp.bfloat16)                  # (HP, 4*HP) for MXU
    b_row = b_p.reshape(1, 4 * HP).astype(jnp.float32)
    w_lin_t = W_lin_p.T.astype(jnp.float32)                 # (HP, 1)
    b_lin2d = b_lin.reshape(1, 1).astype(jnp.float32)

    seq_len = int(x.size)
    x2d = x.reshape(seq_len, 1).astype(jnp.float32)

    # ---- wrapper prepass (plain XLA, fully parallel, lane-dense) ----
    xproj = x2d * w_ih_row + b_row                          # (seq, 4*HP) f32

    # pad to a multiple of SLAB and chunk for streaming through the grid
    seq8 = -(-seq_len // SLAB) * SLAB
    chunk = min(seq8, MAX_CHUNK)
    seq_pad = -(-seq8 // chunk) * chunk
    num_chunks = seq_pad // chunk
    needs_mask = seq_pad != seq_len
    if needs_mask:
        xproj = jnp.pad(xproj, ((0, seq_pad - seq_len), (0, 0)))

    kernel = _make_lstm_kernel(chunk, seq_len, needs_mask)

    cost = pl.CostEstimate(
        flops=seq_len * (2 * HP * 4 * HP + 10 * HP),
        transcendentals=seq_len * 5 * HP,
        bytes_accessed=int(xproj.size * 4 + w_hh_t.size * 2
                           + w_lin_t.size * 4 + 8),
    )

    pred = pl.pallas_call(
        kernel,
        out_shape=jax.ShapeDtypeStruct((1, 1), jnp.float32),
        grid_spec=pltpu.PrefetchScalarGridSpec(
            num_scalar_prefetch=0,
            grid=(num_chunks,),
            in_specs=[
                pl.BlockSpec((chunk, 4 * HP), lambda c: (c, 0)),   # xproj chunk
                pl.BlockSpec((HP, 4 * HP), lambda c: (0, 0)),      # W_hh (bf16)
                pl.BlockSpec((HP, 1), lambda c: (0, 0)),           # W_lin
                pl.BlockSpec((1, 1), lambda c: (0, 0)),            # b_lin
            ],
            out_specs=pl.BlockSpec((1, 1), lambda c: (0, 0)),
            scratch_shapes=[pltpu.VMEM((1, HP), jnp.float32),      # h state
                            pltpu.VMEM((1, HP), jnp.float32)],     # c state
        ),
        compiler_params=pltpu.CompilerParams(
            dimension_semantics=("arbitrary",),
            vmem_limit_bytes=32 * 1024 * 1024),
        cost_estimate=cost,
    )(xproj, w_hh_t, w_lin_t, b_lin2d)

    return pred[0]                                          # shape (1,)


def lstm_ref_f32(x, params):
    """Pure-f32 reference with exact PyTorch nn.LSTM + Linear semantics."""
    W_ih, W_hh, b_ih, b_hh, W_lin, b_lin = params
    xs = x.reshape(-1, 1)

    def step(carry, x_t):
        h, c = carry
        z = W_ih @ x_t + W_hh @ h + b_ih + b_hh
        i = jax.nn.sigmoid(z[0 * H:1 * H])
        f = jax.nn.sigmoid(z[1 * H:2 * H])
        g = jnp.tanh(z[2 * H:3 * H])
        o = jax.nn.sigmoid(z[3 * H:4 * H])
        c = f * c + i * g
        h = o * jnp.tanh(c)
        return (h, c), None

    (h, _), _ = lax.scan(step, (jnp.zeros(H), jnp.zeros(H)), xs)
    return W_lin @ h + b_lin                                # (1,)


def lstm_ref_matched(x, params):
    """Reference mirroring the kernel numerics (bf16 recurrent matvec with f32
    accumulation, tanh-form sigmoid) for a tight-tolerance check."""
    W_ih, W_hh, b_ih, b_hh, W_lin, b_lin = params
    xs = x.reshape(-1, 1)
    W_hh_bf = W_hh.astype(jnp.bfloat16)

    def step(carry, x_t):
        h, c = carry
        z = (W_ih @ x_t + b_ih + b_hh
             + jnp.dot(W_hh_bf, h.astype(jnp.bfloat16),
                       preferred_element_type=jnp.float32))
        i = _sigmoid_tanh(z[0 * H:1 * H])
        f = _sigmoid_tanh(z[1 * H:2 * H])
        g = jnp.tanh(z[2 * H:3 * H])
        o = _sigmoid_tanh(z[3 * H:4 * H])
        c = f * c + i * g
        h = o * jnp.tanh(c)
        return (h, c), None

    (h, _), _ = lax.scan(step, (jnp.zeros(H), jnp.zeros(H)), xs)
    return W_lin @ h + b_lin                                # (1,)


def init_params(key):
    """Deterministic init mirroring PyTorch shapes (uniform +-1/sqrt(H))."""
    k = jax.random.split(key, 6)
    bound = 1.0 / jnp.sqrt(H)
    W_ih = jax.random.uniform(k[0], (4 * H, INPUT_SIZE), jnp.float32, -bound, bound)
    W_hh = jax.random.uniform(k[1], (4 * H, H), jnp.float32, -bound, bound)
    b_ih = jax.random.uniform(k[2], (4 * H,), jnp.float32, -bound, bound)
    b_hh = jax.random.uniform(k[3], (4 * H,), jnp.float32, -bound, bound)
    W_lin = jax.random.uniform(k[4], (OUTPUT_SIZE, H), jnp.float32, -bound, bound)
    b_lin = jax.random.uniform(k[5], (OUTPUT_SIZE,), jnp.float32, -bound, bound)
    return W_ih, W_hh, b_ih, b_hh, W_lin, b_lin


if __name__ == "__main__":
    key = jax.random.PRNGKey(0)
    k_param, k_x = jax.random.split(key)
    params = init_params(k_param)

    # seq_len multiple of SLAB (no tail masking)
    seq_len = 8
    x = jax.random.normal(k_x, (seq_len,), jnp.float32)
    out = jax.block_until_ready(lstm_forward(x, params))
    assert out.shape == (1,), out.shape

    ref_m = lstm_ref_matched(x, params)                     # tight check
    assert jnp.allclose(out, ref_m, atol=1e-4, rtol=1e-4), (out, ref_m)
    ref_f = lstm_ref_f32(x, params)                         # exact-f32 check
    assert jnp.allclose(out, ref_f, atol=5e-2, rtol=5e-2), (out, ref_f)

    # seq_len NOT a multiple of SLAB (exercises the tail-masking path)
    seq_len2 = 12
    x2 = jax.random.normal(jax.random.fold_in(k_x, 1), (seq_len2,), jnp.float32)
    out2 = jax.block_until_ready(lstm_forward(x2, params))
    ref_m2 = lstm_ref_matched(x2, params)
    assert jnp.allclose(out2, ref_m2, atol=1e-4, rtol=1e-4), (out2, ref_m2)
    ref_f2 = lstm_ref_f32(x2, params)
    assert jnp.allclose(out2, ref_f2, atol=5e-2, rtol=5e-2), (out2, ref_f2)

    print("KERNEL_OK")
</pallas_src>

<mosaic_0001>
module attributes {stable_mosaic.version = 11 : i64} {
  func.func @kernel(%arg0: i32, %arg1: memref<8x512xf32, #tpu.memory_space<vmem>>, %arg2: memref<128x512xbf16, #tpu.memory_space<vmem>>, %arg3: memref<128x1xf32, #tpu.memory_space<vmem>>, %arg4: memref<1x1xf32, #tpu.memory_space<vmem>>, %arg5: memref<1x1xf32, #tpu.memory_space<vmem>>, %arg6: memref<1x128xf32, #tpu.memory_space<vmem>>, %arg7: memref<1x128xf32, #tpu.memory_space<vmem>>) attributes {dimension_semantics = [#tpu.dimension_semantics<arbitrary>], iteration_bounds = array<i64: 1>, scalar_prefetch = 0 : i64, scratch_operands = 2 : i64, tpu.core_type = #tpu.core_type<tc>, window_params = [{transform_indices = @transform_0, window_bounds = array<i64: 8, 512>}, {pipeline_mode = #tpu.pipeline_mode<synchronous>, transform_indices = @transform_1, window_bounds = array<i64: 128, 512>}, {pipeline_mode = #tpu.pipeline_mode<synchronous>, transform_indices = @transform_2, window_bounds = array<i64: 128, 1>}, {pipeline_mode = #tpu.pipeline_mode<synchronous>, transform_indices = @transform_3, window_bounds = array<i64: 1, 1>}, {pipeline_mode = #tpu.pipeline_mode<synchronous>, transform_indices = @transform_4, window_bounds = array<i64: 1, 1>}]} {
    %c0_i32 = arith.constant 0 : i32
    %0 = arith.cmpi eq, %arg0, %c0_i32 : i32
    %1 = arith.extui %0 : i1 to i32
    %c0_i32_0 = arith.constant 0 : i32
    %2 = arith.cmpi ne, %1, %c0_i32_0 : i32
    scf.if %2 {
      %cst_51 = arith.constant 0.000000e+00 : f32
      %174 = vector.broadcast %cst_51 : f32 to vector<1x128xf32>
      %c0_52 = arith.constant 0 : index
      %c0_53 = arith.constant 0 : index
      %175 = vector.load %arg6[%c0_52, %c0_53] : memref<1x128xf32, #tpu.memory_space<vmem>>, vector<1x128xf32>
      tpu.vector_store %arg6[%c0_52, %c0_53], %174 {strides = array<i32>} : memref<1x128xf32, #tpu.memory_space<vmem>>, vector<1x128xf32>,
      %cst_54 = arith.constant 0.000000e+00 : f32
      %176 = vector.broadcast %cst_54 : f32 to vector<1x128xf32>
      %c0_55 = arith.constant 0 : index
      %c0_56 = arith.constant 0 : index
      %177 = vector.load %arg7[%c0_55, %c0_56] : memref<1x128xf32, #tpu.memory_space<vmem>>, vector<1x128xf32>
      tpu.vector_store %arg7[%c0_55, %c0_56], %176 {strides = array<i32>} : memref<1x128xf32, #tpu.memory_space<vmem>>, vector<1x128xf32>,
    } else {
    }
    %c0 = arith.constant 0 : index
    %c0_1 = arith.constant 0 : index
    %3 = vector.load %arg6[%c0, %c0_1] : memref<1x128xf32, #tpu.memory_space<vmem>>, vector<1x128xf32>
    %c0_2 = arith.constant 0 : index
    %c0_3 = arith.constant 0 : index
    %4 = vector.load %arg7[%c0_2, %c0_3] : memref<1x128xf32, #tpu.memory_space<vmem>>, vector<1x128xf32>
    %c0_i32_4 = arith.constant 0 : i32
    %c8_i32 = arith.constant 8 : i32
    %5 = arith.muli %c0_i32_4, %c8_i32 : i32
    %6 = tpu.assume_multiple %5, 8 : i32
    %7 = arith.index_cast %6 : i32 to index
    %c0_5 = arith.constant 0 : index
    %8 = vector.load %arg1[%7, %c0_5] : memref<8x512xf32, #tpu.memory_space<vmem>>, vector<8x512xf32>
    %9 = vector.extract_strided_slice %8 {offsets = [0, 0], sizes = [1, 512], strides = [1, 1]} : vector<8x512xf32> to vector<1x512xf32>
    %10 = arith.truncf %3 : vector<1x128xf32> to vector<1x128xbf16>
    %c0_6 = arith.constant 0 : index
    %c0_7 = arith.constant 0 : index
    %11 = vector.load %arg2[%c0_6, %c0_7] : memref<128x512xbf16, #tpu.memory_space<vmem>>, vector<128x512xbf16>
    %cst = arith.constant dense<0.000000e+00> : vector<1x512xf32>
    %12 = tpu.matmul %10, %11, %cst {dimension_numbers = #tpu.dot_dimension_numbers<[1], [0], [0], [1], [0, 0, 1, 1], [], []>} : vector<1x128xbf16>, vector<128x512xbf16>, vector<1x512xf32> -> vector<1x512xf32>
    %13 = arith.addf %9, %12 : vector<1x512xf32>
    %14 = math.tanh %13 : vector<1x512xf32>
    %15 = vector.extract_strided_slice %14 {offsets = [0, 0], sizes = [1, 384], strides = [1, 1]} : vector<1x512xf32> to vector<1x384xf32>
    %cst_8 = arith.constant 5.000000e-01 : f32
    %16 = vector.broadcast %cst_8 : f32 to vector<1x384xf32>
    %17 = arith.mulf %16, %15 : vector<1x384xf32>
    %cst_9 = arith.constant 5.000000e-01 : f32
    %18 = vector.broadcast %cst_9 : f32 to vector<1x384xf32>
    %19 = arith.addf %17, %18 : vector<1x384xf32>
    %20 = vector.extract_strided_slice %19 {offsets = [0, 0], sizes = [1, 128], strides = [1, 1]} : vector<1x384xf32> to vector<1x128xf32>
    %21 = vector.extract_strided_slice %19 {offsets = [0, 128], sizes = [1, 128], strides = [1, 1]} : vector<1x384xf32> to vector<1x128xf32>
    %22 = vector.extract_strided_slice %19 {offsets = [0, 256], sizes = [1, 128], strides = [1, 1]} : vector<1x384xf32> to vector<1x128xf32>
    %23 = vector.extract_strided_slice %14 {offsets = [0, 384], sizes = [1, 128], strides = [1, 1]} : vector<1x512xf32> to vector<1x128xf32>
    %24 = arith.mulf %21, %4 : vector<1x128xf32>
    %25 = arith.mulf %20, %23 : vector<1x128xf32>
    %26 = arith.addf %24, %25 : vector<1x128xf32>
    %27 = math.tanh %26 : vector<1x128xf32>
    %28 = arith.mulf %22, %27 : vector<1x128xf32>
    %29 = vector.extract_strided_slice %8 {offsets = [1, 0], sizes = [1, 512], strides = [1, 1]} : vector<8x512xf32> to vector<1x512xf32>
    %30 = arith.truncf %28 : vector<1x128xf32> to vector<1x128xbf16>
    %c0_10 = arith.constant 0 : index
    %c0_11 = arith.constant 0 : index
    %31 = vector.load %arg2[%c0_10, %c0_11] : memref<128x512xbf16, #tpu.memory_space<vmem>>, vector<128x512xbf16>
    %cst_12 = arith.constant dense<0.000000e+00> : vector<1x512xf32>
    %32 = tpu.matmul %30, %31, %cst_12 {dimension_numbers = #tpu.dot_dimension_numbers<[1], [0], [0], [1], [0, 0, 1, 1], [], []>} : vector<1x128xbf16>, vector<128x512xbf16>, vector<1x512xf32> -> vector<1x512xf32>
    %33 = arith.addf %29, %32 : vector<1x512xf32>
    %34 = math.tanh %33 : vector<1x512xf32>
    %35 = vector.extract_strided_slice %34 {offsets = [0, 0], sizes = [1, 384], strides = [1, 1]} : vector<1x512xf32> to vector<1x384xf32>
    %cst_13 = arith.constant 5.000000e-01 : f32
    %36 = vector.broadcast %cst_13 : f32 to vector<1x384xf32>
    %37 = arith.mulf %36, %35 : vector<1x384xf32>
    %cst_14 = arith.constant 5.000000e-01 : f32
    %38 = vector.broadcast %cst_14 : f32 to vector<1x384xf32>
    %39 = arith.addf %37, %38 : vector<1x384xf32>
    %40 = vector.extract_strided_slice %39 {offsets = [0, 0], sizes = [1, 128], strides = [1, 1]} : vector<1x384xf32> to vector<1x128xf32>
    %41 = vector.extract_strided_slice %39 {offsets = [0, 128], sizes = [1, 128], strides = [1, 1]} : vector<1x384xf32> to vector<1x128xf32>
    %42 = vector.extract_strided_slice %39 {offsets = [0, 256], sizes = [1, 128], strides = [1, 1]} : vector<1x384xf32> to vector<1x128xf32>
    %43 = vector.extract_strided_slice %34 {offsets = [0, 384], sizes = [1, 128], strides = [1, 1]} : vector<1x512xf32> to vector<1x128xf32>
    %44 = arith.mulf %41, %26 : vector<1x128xf32>
    %45 = arith.mulf %40, %43 : vector<1x128xf32>
    %46 = arith.addf %44, %45 : vector<1x128xf32>
    %47 = math.tanh %46 : vector<1x128xf32>
    %48 = arith.mulf %42, %47 : vector<1x128xf32>
    %49 = vector.extract_strided_slice %8 {offsets = [2, 0], sizes = [1, 512], strides = [1, 1]} : vector<8x512xf32> to vector<1x512xf32>
    %50 = arith.truncf %48 : vector<1x128xf32> to vector<1x128xbf16>
    %c0_15 = arith.constant 0 : index
    %c0_16 = arith.constant 0 : index
    %51 = vector.load %arg2[%c0_15, %c0_16] : memref<128x512xbf16, #tpu.memory_space<vmem>>, vector<128x512xbf16>
    %cst_17 = arith.constant dense<0.000000e+00> : vector<1x512xf32>
    %52 = tpu.matmul %50, %51, %cst_17 {dimension_numbers = #tpu.dot_dimension_numbers<[1], [0], [0], [1], [0, 0, 1, 1], [], []>} : vector<1x128xbf16>, vector<128x512xbf16>, vector<1x512xf32> -> vector<1x512xf32>
    %53 = arith.addf %49, %52 : vector<1x512xf32>
    %54 = math.tanh %53 : vector<1x512xf32>
    %55 = vector.extract_strided_slice %54 {offsets = [0, 0], sizes = [1, 384], strides = [1, 1]} : vector<1x512xf32> to vector<1x384xf32>
    %cst_18 = arith.constant 5.000000e-01 : f32
    %56 = vector.broadcast %cst_18 : f32 to vector<1x384xf32>
    %57 = arith.mulf %56, %55 : vector<1x384xf32>
    %cst_19 = arith.constant 5.000000e-01 : f32
    %58 = vector.broadcast %cst_19 : f32 to vector<1x384xf32>
    %59 = arith.addf %57, %58 : vector<1x384xf32>
    %60 = vector.extract_strided_slice %59 {offsets = [0, 0], sizes = [1, 128], strides = [1, 1]} : vector<1x384xf32> to vector<1x128xf32>
    %61 = vector.extract_strided_slice %59 {offsets = [0, 128], sizes = [1, 128], strides = [1, 1]} : vector<1x384xf32> to vector<1x128xf32>
    %62 = vector.extract_strided_slice %59 {offsets = [0, 256], sizes = [1, 128], strides = [1, 1]} : vector<1x384xf32> to vector<1x128xf32>
    %63 = vector.extract_strided_slice %54 {offsets = [0, 384], sizes = [1, 128], strides = [1, 1]} : vector<1x512xf32> to vector<1x128xf32>
    %64 = arith.mulf %61, %46 : vector<1x128xf32>
    %65 = arith.mulf %60, %63 : vector<1x128xf32>
    %66 = arith.addf %64, %65 : vector<1x128xf32>
    %67 = math.tanh %66 : vector<1x128xf32>
    %68 = arith.mulf %62, %67 : vector<1x128xf32>
    %69 = vector.extract_strided_slice %8 {offsets = [3, 0], sizes = [1, 512], strides = [1, 1]} : vector<8x512xf32> to vector<1x512xf32>
    %70 = arith.truncf %68 : vector<1x128xf32> to vector<1x128xbf16>
    %c0_20 = arith.constant 0 : index
    %c0_21 = arith.constant 0 : index
    %71 = vector.load %arg2[%c0_20, %c0_21] : memref<128x512xbf16, #tpu.memory_space<vmem>>, vector<128x512xbf16>
    %cst_22 = arith.constant dense<0.000000e+00> : vector<1x512xf32>
    %72 = tpu.matmul %70, %71, %cst_22 {dimension_numbers = #tpu.dot_dimension_numbers<[1], [0], [0], [1], [0, 0, 1, 1], [], []>} : vector<1x128xbf16>, vector<128x512xbf16>, vector<1x512xf32> -> vector<1x512xf32>
    %73 = arith.addf %69, %72 : vector<1x512xf32>
    %74 = math.tanh %73 : vector<1x512xf32>
    %75 = vector.extract_strided_slice %74 {offsets = [0, 0], sizes = [1, 384], strides = [1, 1]} : vector<1x512xf32> to vector<1x384xf32>
    %cst_23 = arith.constant 5.000000e-01 : f32
    %76 = vector.broadcast %cst_23 : f32 to vector<1x384xf32>
    %77 = arith.mulf %76, %75 : vector<1x384xf32>
    %cst_24 = arith.constant 5.000000e-01 : f32
    %78 = vector.broadcast %cst_24 : f32 to vector<1x384xf32>
    %79 = arith.addf %77, %78 : vector<1x384xf32>
    %80 = vector.extract_strided_slice %79 {offsets = [0, 0], sizes = [1, 128], strides = [1, 1]} : vector<1x384xf32> to vector<1x128xf32>
    %81 = vector.extract_strided_slice %79 {offsets = [0, 128], sizes = [1, 128], strides = [1, 1]} : vector<1x384xf32> to vector<1x128xf32>
    %82 = vector.extract_strided_slice %79 {offsets = [0, 256], sizes = [1, 128], strides = [1, 1]} : vector<1x384xf32> to vector<1x128xf32>
    %83 = vector.extract_strided_slice %74 {offsets = [0, 384], sizes = [1, 128], strides = [1, 1]} : vector<1x512xf32> to vector<1x128xf32>
    %84 = arith.mulf %81, %66 : vector<1x128xf32>
    %85 = arith.mulf %80, %83 : vector<1x128xf32>
    %86 = arith.addf %84, %85 : vector<1x128xf32>
    %87 = math.tanh %86 : vector<1x128xf32>
    %88 = arith.mulf %82, %87 : vector<1x128xf32>
    %89 = vector.extract_strided_slice %8 {offsets = [4, 0], sizes = [1, 512], strides = [1, 1]} : vector<8x512xf32> to vector<1x512xf32>
    %90 = arith.truncf %88 : vector<1x128xf32> to vector<1x128xbf16>
    %c0_25 = arith.constant 0 : index
    %c0_26 = arith.constant 0 : index
    %91 = vector.load %arg2[%c0_25, %c0_26] : memref<128x512xbf16, #tpu.memory_space<vmem>>, vector<128x512xbf16>
    %cst_27 = arith.constant dense<0.000000e+00> : vector<1x512xf32>
    %92 = tpu.matmul %90, %91, %cst_27 {dimension_numbers = #tpu.dot_dimension_numbers<[1], [0], [0], [1], [0, 0, 1, 1], [], []>} : vector<1x128xbf16>, vector<128x512xbf16>, vector<1x512xf32> -> vector<1x512xf32>
    %93 = arith.addf %89, %92 : vector<1x512xf32>
    %94 = math.tanh %93 : vector<1x512xf32>
    %95 = vector.extract_strided_slice %94 {offsets = [0, 0], sizes = [1, 384], strides = [1, 1]} : vector<1x512xf32> to vector<1x384xf32>
    %cst_28 = arith.constant 5.000000e-01 : f32
    %96 = vector.broadcast %cst_28 : f32 to vector<1x384xf32>
    %97 = arith.mulf %96, %95 : vector<1x384xf32>
    %cst_29 = arith.constant 5.000000e-01 : f32
    %98 = vector.broadcast %cst_29 : f32 to vector<1x384xf32>
    %99 = arith.addf %97, %98 : vector<1x384xf32>
    %100 = vector.extract_strided_slice %99 {offsets = [0, 0], sizes = [1, 128], strides = [1, 1]} : vector<1x384xf32> to vector<1x128xf32>
    %101 = vector.extract_strided_slice %99 {offsets = [0, 128], sizes = [1, 128], strides = [1, 1]} : vector<1x384xf32> to vector<1x128xf32>
    %102 = vector.extract_strided_slice %99 {offsets = [0, 256], sizes = [1, 128], strides = [1, 1]} : vector<1x384xf32> to vector<1x128xf32>
    %103 = vector.extract_strided_slice %94 {offsets = [0, 384], sizes = [1, 128], strides = [1, 1]} : vector<1x512xf32> to vector<1x128xf32>
    %104 = arith.mulf %101, %86 : vector<1x128xf32>
    %105 = arith.mulf %100, %103 : vector<1x128xf32>
    %106 = arith.addf %104, %105 : vector<1x128xf32>
    %107 = math.tanh %106 : vector<1x128xf32>
    %108 = arith.mulf %102, %107 : vector<1x128xf32>
    %109 = vector.extract_strided_slice %8 {offsets = [5, 0], sizes = [1, 512], strides = [1, 1]} : vector<8x512xf32> to vector<1x512xf32>
    %110 = arith.truncf %108 : vector<1x128xf32> to vector<1x128xbf16>
    %c0_30 = arith.constant 0 : index
    %c0_31 = arith.constant 0 : index
    %111 = vector.load %arg2[%c0_30, %c0_31] : memref<128x512xbf16, #tpu.memory_space<vmem>>, vector<128x512xbf16>
    %cst_32 = arith.constant dense<0.000000e+00> : vector<1x512xf32>
    %112 = tpu.matmul %110, %111, %cst_32 {dimension_numbers = #tpu.dot_dimension_numbers<[1], [0], [0], [1], [0, 0, 1, 1], [], []>} : vector<1x128xbf16>, vector<128x512xbf16>, vector<1x512xf32> -> vector<1x512xf32>
    %113 = arith.addf %109, %112 : vector<1x512xf32>
    %114 = math.tanh %113 : vector<1x512xf32>
    %115 = vector.extract_strided_slice %114 {offsets = [0, 0], sizes = [1, 384], strides = [1, 1]} : vector<1x512xf32> to vector<1x384xf32>
    %cst_33 = arith.constant 5.000000e-01 : f32
    %116 = vector.broadcast %cst_33 : f32 to vector<1x384xf32>
    %117 = arith.mulf %116, %115 : vector<1x384xf32>
    %cst_34 = arith.constant 5.000000e-01 : f32
    %118 = vector.broadcast %cst_34 : f32 to vector<1x384xf32>
    %119 = arith.addf %117, %118 : vector<1x384xf32>
    %120 = vector.extract_strided_slice %119 {offsets = [0, 0], sizes = [1, 128], strides = [1, 1]} : vector<1x384xf32> to vector<1x128xf32>
    %121 = vector.extract_strided_slice %119 {offsets = [0, 128], sizes = [1, 128], strides = [1, 1]} : vector<1x384xf32> to vector<1x128xf32>
    %122 = vector.extract_strided_slice %119 {offsets = [0, 256], sizes = [1, 128], strides = [1, 1]} : vector<1x384xf32> to vector<1x128xf32>
    %123 = vector.extract_strided_slice %114 {offsets = [0, 384], sizes = [1, 128], strides = [1, 1]} : vector<1x512xf32> to vector<1x128xf32>
    %124 = arith.mulf %121, %106 : vector<1x128xf32>
    %125 = arith.mulf %120, %123 : vector<1x128xf32>
    %126 = arith.addf %124, %125 : vector<1x128xf32>
    %127 = math.tanh %126 : vector<1x128xf32>
    %128 = arith.mulf %122, %127 : vector<1x128xf32>
    %129 = vector.extract_strided_slice %8 {offsets = [6, 0], sizes = [1, 512], strides = [1, 1]} : vector<8x512xf32> to vector<1x512xf32>
    %130 = arith.truncf %128 : vector<1x128xf32> to vector<1x128xbf16>
    %c0_35 = arith.constant 0 : index
    %c0_36 = arith.constant 0 : index
    %131 = vector.load %arg2[%c0_35, %c0_36] : memref<128x512xbf16, #tpu.memory_space<vmem>>, vector<128x512xbf16>
    %cst_37 = arith.constant dense<0.000000e+00> : vector<1x512xf32>
    %132 = tpu.matmul %130, %131, %cst_37 {dimension_numbers = #tpu.dot_dimension_numbers<[1], [0], [0], [1], [0, 0, 1, 1], [], []>} : vector<1x128xbf16>, vector<128x512xbf16>, vector<1x512xf32> -> vector<1x512xf32>
    %133 = arith.addf %129, %132 : vector<1x512xf32>
    %134 = math.tanh %133 : vector<1x512xf32>
    %135 = vector.extract_strided_slice %134 {offsets = [0, 0], sizes = [1, 384], strides = [1, 1]} : vector<1x512xf32> to vector<1x384xf32>
    %cst_38 = arith.constant 5.000000e-01 : f32
    %136 = vector.broadcast %cst_38 : f32 to vector<1x384xf32>
    %137 = arith.mulf %136, %135 : vector<1x384xf32>
    %cst_39 = arith.constant 5.000000e-01 : f32
    %138 = vector.broadcast %cst_39 : f32 to vector<1x384xf32>
    %139 = arith.addf %137, %138 : vector<1x384xf32>
    %140 = vector.extract_strided_slice %139 {offsets = [0, 0], sizes = [1, 128], strides = [1, 1]} : vector<1x384xf32> to vector<1x128xf32>
    %141 = vector.extract_strided_slice %139 {offsets = [0, 128], sizes = [1, 128], strides = [1, 1]} : vector<1x384xf32> to vector<1x128xf32>
    %142 = vector.extract_strided_slice %139 {offsets = [0, 256], sizes = [1, 128], strides = [1, 1]} : vector<1x384xf32> to vector<1x128xf32>
    %143 = vector.extract_strided_slice %134 {offsets = [0, 384], sizes = [1, 128], strides = [1, 1]} : vector<1x512xf32> to vector<1x128xf32>
    %144 = arith.mulf %141, %126 : vector<1x128xf32>
    %145 = arith.mulf %140, %143 : vector<1x128xf32>
    %146 = arith.addf %144, %145 : vector<1x128xf32>
    %147 = math.tanh %146 : vector<1x128xf32>
    %148 = arith.mulf %142, %147 : vector<1x128xf32>
    %149 = vector.extract_strided_slice %8 {offsets = [7, 0], sizes = [1, 512], strides = [1, 1]} : vector<8x512xf32> to vector<1x512xf32>
    %150 = arith.truncf %148 : vector<1x128xf32> to vector<1x128xbf16>
    %c0_40 = arith.constant 0 : index
    %c0_41 = arith.constant 0 : index
    %151 = vector.load %arg2[%c0_40, %c0_41] : memref<128x512xbf16, #tpu.memory_space<vmem>>, vector<128x512xbf16>
    %cst_42 = arith.constant dense<0.000000e+00> : vector<1x512xf32>
    %152 = tpu.matmul %150, %151, %cst_42 {dimension_numbers = #tpu.dot_dimension_numbers<[1], [0], [0], [1], [0, 0, 1, 1], [], []>} : vector<1x128xbf16>, vector<128x512xbf16>, vector<1x512xf32> -> vector<1x512xf32>
    %153 = arith.addf %149, %152 : vector<1x512xf32>
    %154 = math.tanh %153 : vector<1x512xf32>
    %155 = vector.extract_strided_slice %154 {offsets = [0, 0], sizes = [1, 384], strides = [1, 1]} : vector<1x512xf32> to vector<1x384xf32>
    %cst_43 = arith.constant 5.000000e-01 : f32
    %156 = vector.broadcast %cst_43 : f32 to vector<1x384xf32>
    %157 = arith.mulf %156, %155 : vector<1x384xf32>
    %cst_44 = arith.constant 5.000000e-01 : f32
    %158 = vector.broadcast %cst_44 : f32 to vector<1x384xf32>
    %159 = arith.addf %157, %158 : vector<1x384xf32>
    %160 = vector.extract_strided_slice %159 {offsets = [0, 0], sizes = [1, 128], strides = [1, 1]} : vector<1x384xf32> to vector<1x128xf32>
    %161 = vector.extract_strided_slice %159 {offsets = [0, 128], sizes = [1, 128], strides = [1, 1]} : vector<1x384xf32> to vector<1x128xf32>
    %162 = vector.extract_strided_slice %159 {offsets = [0, 256], sizes = [1, 128], strides = [1, 1]} : vector<1x384xf32> to vector<1x128xf32>
    %163 = vector.extract_strided_slice %154 {offsets = [0, 384], sizes = [1, 128], strides = [1, 1]} : vector<1x512xf32> to vector<1x128xf32>
    %164 = arith.mulf %161, %146 : vector<1x128xf32>
    %165 = arith.mulf %160, %163 : vector<1x128xf32>
    %166 = arith.addf %164, %165 : vector<1x128xf32>
    %167 = math.tanh %166 : vector<1x128xf32>
    %168 = arith.mulf %162, %167 : vector<1x128xf32>
    %c1_i32 = arith.constant 1 : i32
    %c0_45 = arith.constant 0 : index
    %c0_46 = arith.constant 0 : index
    %169 = vector.load %arg6[%c0_45, %c0_46] : memref<1x128xf32, #tpu.memory_space<vmem>>, vector<1x128xf32>
    tpu.vector_store %arg6[%c0_45, %c0_46], %168 {strides = array<i32>} : memref<1x128xf32, #tpu.memory_space<vmem>>, vector<1x128xf32>,
    %c0_47 = arith.constant 0 : index
    %c0_48 = arith.constant 0 : index
    %170 = vector.load %arg7[%c0_47, %c0_48] : memref<1x128xf32, #tpu.memory_space<vmem>>, vector<1x128xf32>
    tpu.vector_store %arg7[%c0_47, %c0_48], %166 {strides = array<i32>} : memref<1x128xf32, #tpu.memory_space<vmem>>, vector<1x128xf32>,
    %c0_i32_49 = arith.constant 0 : i32
    %171 = arith.cmpi eq, %arg0, %c0_i32_49 : i32
    %172 = arith.extui %171 : i1 to i32
    %c0_i32_50 = arith.constant 0 : i32
    %173 = arith.cmpi ne, %172, %c0_i32_50 : i32
    scf.if %173 {
      %c0_51 = arith.constant 0 : index
      %c0_52 = arith.constant 0 : index
      %174 = vector.load %arg3[%c0_51, %c0_52] : memref<128x1xf32, #tpu.memory_space<vmem>>, vector<128x1xf32>
      %cst_53 = arith.constant dense<0.000000e+00> : vector<1x1xf32>
      %175 = tpu.matmul %168, %174, %cst_53 {dimension_numbers = #tpu.dot_dimension_numbers<[1], [0], [0], [1], [0, 0, 1, 1], [], []>} : vector<1x128xf32>, vector<128x1xf32>, vector<1x1xf32> -> vector<1x1xf32>
      %c0_54 = arith.constant 0 : index
      %c0_55 = arith.constant 0 : index
      %176 = vector.load %arg4[%c0_54, %c0_55] : memref<1x1xf32, #tpu.memory_space<vmem>>, vector<1x1xf32>
      %177 = arith.addf %175, %176 : vector<1x1xf32>
      %c0_56 = arith.constant 0 : index
      %c0_57 = arith.constant 0 : index
      %178 = vector.load %arg5[%c0_56, %c0_57] : memref<1x1xf32, #tpu.memory_space<vmem>>, vector<1x1xf32>
      tpu.vector_store %arg5[%c0_56, %c0_57], %177 {strides = array<i32>} : memref<1x1xf32, #tpu.memory_space<vmem>>, vector<1x1xf32>,
    } else {
    }
    return
  }
  func.func @transform_0(%arg0: i32) -> (i32, i32) {
    %c0_i32 = arith.constant 0 : i32
    %c0_i32_0 = arith.constant 0 : i32
    return %arg0, %c0_i32 : i32, i32
  }
  func.func @transform_1(%arg0: i32) -> (i32, i32) {
    %c0_i32 = arith.constant 0 : i32
    %c0_i32_0 = arith.constant 0 : i32
    %c0_i32_1 = arith.constant 0 : i32
    return %c0_i32, %c0_i32_0 : i32, i32
  }
  func.func @transform_2(%arg0: i32) -> (i32, i32) {
    %c0_i32 = arith.constant 0 : i32
    %c0_i32_0 = arith.constant 0 : i32
    %c0_i32_1 = arith.constant 0 : i32
    return %c0_i32, %c0_i32_0 : i32, i32
  }
  func.func @transform_3(%arg0: i32) -> (i32, i32) {
    %c0_i32 = arith.constant 0 : i32
    %c0_i32_0 = arith.constant 0 : i32
    %c0_i32_1 = arith.constant 0 : i32
    return %c0_i32, %c0_i32_0 : i32, i32
  }
  func.func @transform_4(%arg0: i32) -> (i32, i32) {
    %c0_i32 = arith.constant 0 : i32
    %c0_i32_0 = arith.constant 0 : i32
    %c0_i32_1 = arith.constant 0 : i32
    return %c0_i32, %c0_i32_0 : i32, i32
  }
}

</mosaic_0001>

<llo_original>
// kernel: tpu_custom_call.1
$region0: #{tpu_custom_call.1}
  #allocation0 [shape = 'u32[]', space=smem, size = 0x4, offset = 0x4, fixed_abs, tag = 'smem constant byte address 0x4 - core index']
  #allocation1 [shape = 'u32[144,128]{1,0:T(1,128)}', space=vmem, size = 0x12000, scoped, tag = 'internal scratch']
  #allocation2 [shape = 'f32[1,128]{1,0:T(1,128)}', space=vmem, size = 0x200, scoped, tag = 'scratch operand']
  #allocation3 [shape = 'f32[1,128]{1,0:T(1,128)}', space=vmem, size = 0x200, scoped, tag = 'scratch operand']
  #allocation4 [shape = 'f32[1,1]{1,0:T(1,128)S(1)}', space=vmem, size = 0x200, scoped, tag = 'scoped memory for tpu_custom_call.1']
  %s0 = inlined_call_operand.vmem [shape: f32[8,512], index: 0, kind: input, shape index: {}]
  %s1 = inlined_call_operand.hbm [shape: bf16[128,512], index: 1, kind: input, shape index: {}]
  %s2 = inlined_call_operand.vmem [shape: f32[128,1], index: 2, kind: input, shape index: {}]
  %s3 = inlined_call_operand.<no memory space> [shape: f32[1,1], index: 3, kind: input, shape index: {}]
  %s4 = inlined_call_operand.hbm [shape: f32[1,1], index: 4, kind: output, shape index: {}]
  %s5 = sld [smem:[#allocation0]]
  $region38: #{tpu_custom_call.1} parent=0
    _
  %s7 = ssub.s32 1, %s5
  %s8 = scalar_select 0, %s7, %s5
  %v9 = vstv %s3
  %10 = vst [vmem:[#allocation4] sm:$0x1] %v9
  $region1: #{tpu_custom_call.1} parent=0
    #allocation5 [shape = 'u8[131072]{0}', space=vmem, size = 0x20000, scoped, tag = 'input window, operand 1, single buffered']
    #allocation6 [shape = 's32[1]{0}', space=sflag, size = 0x4, scoped, tag = 'scoped memory for tpu_custom_call.1']
    #allocation7 [shape = 's32[1]{0}', space=sflag, size = 0x4, scoped, tag = 'scoped memory for tpu_custom_call.1']
    #allocation8 [shape = 'u8[512]{0}', space=vmem, size = 0x400, scoped, tag = 'output window, operand 0, single buffered']
    %11 = vsyncpa [#allocation6], 0
    %12 = vsyncpa [#allocation7], 0
    // Predicated region
    $region2: #{tpu_custom_call.1} parent=1 // pred_check
      _
    $region3: #{tpu_custom_call.1} parent=1 // pred_check_branch
      %14 = sbr.rel (0) target = $region5
    $region4: #{tpu_custom_call.1} parent=1 // pred_region
      _
    $region5: #{tpu_custom_call.1} parent=1 // pred_fallthru
      _
    // Predicated region
    $region6: #{tpu_custom_call.1} parent=1 // pred_check
      _
    $region7: #{tpu_custom_call.1} parent=1 // pred_check_branch
      %16 = sbr.rel (0) target = $region9
    $region8: #{tpu_custom_call.1} parent=1 // pred_region
      %s18 = ssub.s32 4096, 4096
      %19 = vsyncadd [#allocation6], %s18
      %s20 = sshll.u32 [#allocation5], 4
      %s21 = int_to_ptr.vmem [resolvable:$true] %s20
      %26 = dma.hbm_to_vmem [thread:$0]  %s1, 4096, %s21, [#allocation6], 256, 256, 16
    $region9: #{tpu_custom_call.1} parent=1 // pred_fallthru
      _
    // Predicated region
    $region10: #{tpu_custom_call.1} parent=1 // pred_check
      _
    $region11: #{tpu_custom_call.1} parent=1 // pred_check_branch
      %28 = sbr.rel (0) target = $region13
    $region12: #{tpu_custom_call.1} parent=1 // pred_region
      _
    $region13: #{tpu_custom_call.1} parent=1 // pred_fallthru
      _
    // Predicated region
    $region14: #{tpu_custom_call.1} parent=1 // pred_check
      _
    $region15: #{tpu_custom_call.1} parent=1 // pred_check_branch
      %30 = sbr.rel (0) target = $region17
    $region16: #{tpu_custom_call.1} parent=1 // pred_region
      _
    $region17: #{tpu_custom_call.1} parent=1 // pred_fallthru
      _
    // Predicated region
    $region18: #{tpu_custom_call.1} parent=1 // pred_check
      _
    $region19: #{tpu_custom_call.1} parent=1 // pred_check_branch
      %32 = sbr.rel (0) target = $region21
    $region20: #{tpu_custom_call.1} parent=1 // pred_region
      %33 = dma.done [#allocation6], 4096
    $region21: #{tpu_custom_call.1} parent=1 // pred_fallthru
      _
    %p35 = scmp.eq.s32.totalorder 0, 0
    // Predicated region
    $region22: #{tpu_custom_call.1} parent=1 // pred_check
      %p36 = pneg %p35
    $region23: #{tpu_custom_call.1} parent=1 // pred_check_branch
      %38 = sbr.rel (%p36) target = $region25
    $region24: #{tpu_custom_call.1} parent=1 // pred_region
      %39 = vst [vmem:[#allocation2] sm:$0x1] 0.0
      %40 = vst [vmem:[#allocation3] sm:$0x1] 0.0
    $region25: #{tpu_custom_call.1} parent=1 // pred_fallthru
      _
    %v41 = vld [vmem:[#allocation2] sm:$0x1]
    %v42 = vld [vmem:[#allocation3] sm:$0x1]
    %s43 = smul.u32 0, 4
    %s44 = smul.addr %s43, 8
    %s45 = scalar_lea.vmem %s0, %s44
    %v46 = vld [vmem:[%s45] sm:$0xff]
    %v47 = vld [vmem:[%s45 + $0x8] sm:$0xff]
    %v48 = vld [vmem:[%s45 + $0x10] sm:$0xff]
    %v49 = vld [vmem:[%s45 + $0x18] sm:$0xff]
    %v50 = vpack.c.bf16 %v41, %v41
    %v51 = vld [vmem:[#allocation5] sm:$0xff]
    %v52 = vld [vmem:[#allocation5 + $0x8] sm:$0xff]
    %v53 = vld [vmem:[#allocation5 + $0x10] sm:$0xff]
    %v54 = vld [vmem:[#allocation5 + $0x18] sm:$0xff]
    %v55 = vld [vmem:[#allocation5 + $0x20] sm:$0xff]
    %v56 = vld [vmem:[#allocation5 + $0x28] sm:$0xff]
    %v57 = vld [vmem:[#allocation5 + $0x30] sm:$0xff]
    %v58 = vld [vmem:[#allocation5 + $0x38] sm:$0xff]
    %v59 = vld [vmem:[#allocation5 + $0x40] sm:$0xff]
    %v60 = vld [vmem:[#allocation5 + $0x48] sm:$0xff]
    %v61 = vld [vmem:[#allocation5 + $0x50] sm:$0xff]
    %v62 = vld [vmem:[#allocation5 + $0x58] sm:$0xff]
    %v63 = vld [vmem:[#allocation5 + $0x60] sm:$0xff]
    %v64 = vld [vmem:[#allocation5 + $0x68] sm:$0xff]
    %v65 = vld [vmem:[#allocation5 + $0x70] sm:$0xff]
    %v66 = vld [vmem:[#allocation5 + $0x78] sm:$0xff]
    %v67 = vld [vmem:[#allocation5 + $0x80] sm:$0xff]
    %v68 = vld [vmem:[#allocation5 + $0x88] sm:$0xff]
    %v69 = vld [vmem:[#allocation5 + $0x90] sm:$0xff]
    %v70 = vld [vmem:[#allocation5 + $0x98] sm:$0xff]
    %v71 = vld [vmem:[#allocation5 + $0xa0] sm:$0xff]
    %v72 = vld [vmem:[#allocation5 + $0xa8] sm:$0xff]
    %v73 = vld [vmem:[#allocation5 + $0xb0] sm:$0xff]
    %v74 = vld [vmem:[#allocation5 + $0xb8] sm:$0xff]
    %v75 = vld [vmem:[#allocation5 + $0xc0] sm:$0xff]
    %v76 = vld [vmem:[#allocation5 + $0xc8] sm:$0xff]
    %v77 = vld [vmem:[#allocation5 + $0xd0] sm:$0xff]
    %v78 = vld [vmem:[#allocation5 + $0xd8] sm:$0xff]
    %v79 = vld [vmem:[#allocation5 + $0xe0] sm:$0xff]
    %v80 = vld [vmem:[#allocation5 + $0xe8] sm:$0xff]
    %v81 = vld [vmem:[#allocation5 + $0xf0] sm:$0xff]
    %v82 = vld [vmem:[#allocation5 + $0xf8] sm:$0xff]
    %v115 = vunpack.c.l.b16 %v51
    %v116 = vunpack.c.h.b16 %v51
    %v117 = vunpack.c.l.b16 %v52
    %v118 = vunpack.c.h.b16 %v52
    %v119 = vunpack.c.l.b16 %v53
    %v120 = vunpack.c.h.b16 %v53
    %v121 = vunpack.c.l.b16 %v54
    %v122 = vunpack.c.h.b16 %v54
    %v123 = vunpack.c.l.b16 %v55
    %v124 = vunpack.c.h.b16 %v55
    %v125 = vunpack.c.l.b16 %v56
    %v126 = vunpack.c.h.b16 %v56
    %v127 = vunpack.c.l.b16 %v57
    %v128 = vunpack.c.h.b16 %v57
    %v129 = vunpack.c.l.b16 %v58
    %v130 = vunpack.c.h.b16 %v58
    %v131 = vunpack.c.l.b16 %v59
    %v132 = vunpack.c.h.b16 %v59
    %v133 = vunpack.c.l.b16 %v60
    %v134 = vunpack.c.h.b16 %v60
    %v135 = vunpack.c.l.b16 %v61
    %v136 = vunpack.c.h.b16 %v61
    %v137 = vunpack.c.l.b16 %v62
    %v138 = vunpack.c.h.b16 %v62
    %v139 = vunpack.c.l.b16 %v63
    %v140 = vunpack.c.h.b16 %v63
    %v141 = vunpack.c.l.b16 %v64
    %v142 = vunpack.c.h.b16 %v64
    %v143 = vunpack.c.l.b16 %v65
    %v144 = vunpack.c.h.b16 %v65
    %v145 = vunpack.c.l.b16 %v66
    %v146 = vunpack.c.h.b16 %v66
    %v147 = vunpack.c.l.b16 %v67
    %v148 = vunpack.c.h.b16 %v67
    %v149 = vunpack.c.l.b16 %v68
    %v150 = vunpack.c.h.b16 %v68
    %v151 = vunpack.c.l.b16 %v69
    %v152 = vunpack.c.h.b16 %v69
    %v153 = vunpack.c.l.b16 %v70
    %v154 = vunpack.c.h.b16 %v70
    %v155 = vunpack.c.l.b16 %v71
    %v156 = vunpack.c.h.b16 %v71
    %v157 = vunpack.c.l.b16 %v72
    %v158 = vunpack.c.h.b16 %v72
    %v159 = vunpack.c.l.b16 %v73
    %v160 = vunpack.c.h.b16 %v73
    %v161 = vunpack.c.l.b16 %v74
    %v162 = vunpack.c.h.b16 %v74
    %v163 = vunpack.c.l.b16 %v75
    %v164 = vunpack.c.h.b16 %v75
    %v165 = vunpack.c.l.b16 %v76
    %v166 = vunpack.c.h.b16 %v76
    %v167 = vunpack.c.l.b16 %v77
    %v168 = vunpack.c.h.b16 %v77
    %v169 = vunpack.c.l.b16 %v78
    %v170 = vunpack.c.h.b16 %v78
    %v171 = vunpack.c.l.b16 %v79
    %v172 = vunpack.c.h.b16 %v79
    %v173 = vunpack.c.l.b16 %v80
    %v174 = vunpack.c.h.b16 %v80
    %v175 = vunpack.c.l.b16 %v81
    %v176 = vunpack.c.h.b16 %v81
    %v177 = vunpack.c.l.b16 %v82
    %v178 = vunpack.c.h.b16 %v82
    %v179 = vpack.c.b16 %v119, %v115
    %v180 = vpack.c.b16 %v120, %v116
    %v181 = vpack.c.b16 %v121, %v117
    %v182 = vpack.c.b16 %v122, %v118
    %v183 = vpack.c.b16 %v127, %v123
    %v184 = vpack.c.b16 %v128, %v124
    %v185 = vpack.c.b16 %v129, %v125
    %v186 = vpack.c.b16 %v130, %v126
    %v187 = vpack.c.b16 %v135, %v131
    %v188 = vpack.c.b16 %v136, %v132
    %v189 = vpack.c.b16 %v137, %v133
    %v190 = vpack.c.b16 %v138, %v134
    %v191 = vpack.c.b16 %v143, %v139
    %v192 = vpack.c.b16 %v144, %v140
    %v193 = vpack.c.b16 %v145, %v141
    %v194 = vpack.c.b16 %v146, %v142
    %v195 = vpack.c.b16 %v151, %v147
    %v196 = vpack.c.b16 %v152, %v148
    %v197 = vpack.c.b16 %v153, %v149
    %v198 = vpack.c.b16 %v154, %v150
    %v199 = vpack.c.b16 %v159, %v155
    %v200 = vpack.c.b16 %v160, %v156
    %v201 = vpack.c.b16 %v161, %v157
    %v202 = vpack.c.b16 %v162, %v158
    %v203 = vpack.c.b16 %v167, %v163
    %v204 = vpack.c.b16 %v168, %v164
    %v205 = vpack.c.b16 %v169, %v165
    %v206 = vpack.c.b16 %v170, %v166
    %v207 = vpack.c.b16 %v175, %v171
    %v208 = vpack.c.b16 %v176, %v172
    %v209 = vpack.c.b16 %v177, %v173
    %v210 = vpack.c.b16 %v178, %v174
    %243 = vmatprep.subr.bf16.mxu0 %v180
    %244 = vmatpush1.bf16.msra.mxu0 %v179
    %245 = vmatprep.subr.bf16.mxu0 %v184
    %246 = vmatpush1.bf16.msra.mxu0 %v183
    %247 = vmatprep.subr.bf16.mxu0 %v188
    %248 = vmatpush1.bf16.msra.mxu0 %v187
    %249 = vmatprep.subr.bf16.mxu0 %v192
    %250 = vmatpush1.bf16.msra.mxu0 %v191
    %251 = vmatprep.subr.bf16.mxu0 %v196
    %252 = vmatpush1.bf16.msra.mxu0 %v195
    %253 = vmatprep.subr.bf16.mxu0 %v200
    %254 = vmatpush1.bf16.msra.mxu0 %v199
    %255 = vmatprep.subr.bf16.mxu0 %v204
    %256 = vmatpush1.bf16.msra.mxu0 %v203
    %257 = vmatprep.subr.bf16.mxu0 %v208
    %258 = vmatpush1.bf16.msra.mxu0 %v207
    %259 = vmatprep.subr.bf16.mxu0 0
    %260 = vmatpush1.bf16.msra.mxu0 0
    %261 = vmatprep.subr.bf16.mxu0 0
    %262 = vmatpush1.bf16.msra.mxu0 0
    %263 = vmatprep.subr.bf16.mxu0 0
    %264 = vmatpush1.bf16.msra.mxu0 0
    %265 = vmatprep.subr.bf16.mxu0 0
    %266 = vmatpush1.bf16.msra.mxu0 0
    %267 = vmatprep.subr.bf16.mxu0 0
    %268 = vmatpush1.bf16.msra.mxu0 0
    %269 = vmatprep.subr.bf16.mxu0 0
    %270 = vmatpush1.bf16.msra.mxu0 0
    %271 = vmatprep.subr.bf16.mxu0 0
    %272 = vmatpush1.bf16.msra.mxu0 0
    %273 = vmatprep.subr.bf16.mxu0 0
    %274 = vmatpush1.bf16.msra.mxu0 0
    %275 = vmatprep.mubr.bf16.mxu0 0
    %276 = vmatmul.mubr.bf16.gmra.mrb[0].mxu0 %v50
    %v277 = vpop.f32.mrb[0].mxu0
    %v278 = vadd.f32 0.0, %v277
    %v279 = vpop.f32.mrb[0].mxu0
    %v280 = vadd.f32 0.0, %v279
    %v281 = vpop.f32.mrb[0].mxu0
    %v282 = vpop.f32.mrb[0].mxu0
    %283 = vdwg.mxu0
    %284 = vmatprep.subr.bf16.mxu0 %v182
    %285 = vmatpush1.bf16.msra.mxu0 %v181
    %286 = vmatprep.subr.bf16.mxu0 %v186
    %287 = vmatpush1.bf16.msra.mxu0 %v185
    %288 = vmatprep.subr.bf16.mxu0 %v190
    %289 = vmatpush1.bf16.msra.mxu0 %v189
    %290 = vmatprep.subr.bf16.mxu0 %v194
    %291 = vmatpush1.bf16.msra.mxu0 %v193
    %292 = vmatprep.subr.bf16.mxu0 %v198
    %293 = vmatpush1.bf16.msra.mxu0 %v197
    %294 = vmatprep.subr.bf16.mxu0 %v202
    %295 = vmatpush1.bf16.msra.mxu0 %v201
    %296 = vmatprep.subr.bf16.mxu0 %v206
    %297 = vmatpush1.bf16.msra.mxu0 %v205
    %298 = vmatprep.subr.bf16.mxu0 %v210
    %299 = vmatpush1.bf16.msra.mxu0 %v209
    %300 = vmatprep.subr.bf16.mxu0 0
    %301 = vmatpush1.bf16.msra.mxu0 0
    %302 = vmatprep.subr.bf16.mxu0 0
    %303 = vmatpush1.bf16.msra.mxu0 0
    %304 = vmatprep.subr.bf16.mxu0 0
    %305 = vmatpush1.bf16.msra.mxu0 0
    %306 = vmatprep.subr.bf16.mxu0 0
    %307 = vmatpush1.bf16.msra.mxu0 0
    %308 = vmatprep.subr.bf16.mxu0 0
    %309 = vmatpush1.bf16.msra.mxu0 0
    %310 = vmatprep.subr.bf16.mxu0 0
    %311 = vmatpush1.bf16.msra.mxu0 0
    %312 = vmatprep.subr.bf16.mxu0 0
    %313 = vmatpush1.bf16.msra.mxu0 0
    %314 = vmatprep.subr.bf16.mxu0 0
    %315 = vmatpush1.bf16.msra.mxu0 0
    %316 = vmatprep.mubr.bf16.mxu0 0
    %317 = vmatmul.mubr.bf16.gmra.mrb[0].mxu0 %v50
    %v318 = vpop.f32.mrb[0].mxu0
    %v319 = vadd.f32 0.0, %v318
    %v320 = vpop.f32.mrb[0].mxu0
    %v321 = vadd.f32 0.0, %v320
    %v322 = vpop.f32.mrb[0].mxu0
    %v323 = vpop.f32.mrb[0].mxu0
    %324 = vdwg.mxu0
    %v325 = vadd.f32 %v46, %v278
    %v326 = vadd.f32 %v47, %v280
    %v327 = vadd.f32 %v48, %v319
    %v328 = vadd.f32 %v49, %v321
    %v329 = vtanh.pop %v325
    %v330 = vtanh.pop %v326
    %v331 = vtanh.pop %v327
    %v332 = vtanh.pop %v328
    %v333 = vmul.f32 %v329, 0.5
    %v334 = vmul.f32 %v330, 0.5
    %v335 = vmul.f32 %v331, 0.5
    %v336 = vadd.f32 %v333, 0.5
    %v337 = vadd.f32 %v334, 0.5
    %v338 = vadd.f32 %v335, 0.5
    %v339 = vmul.f32 %v337, %v42
    %v340 = vmul.f32 %v336, %v332
    %v341 = vadd.f32 %v339, %v340
    %v342 = vtanh.pop %v341
    %v343 = vmul.f32 %v338, %v342
    %v344 = vpack.c.bf16 %v343, %v343
    %345 = vmatprep.subr.bf16.mxu0 %v180
    %346 = vmatpush1.bf16.msra.mxu0 %v179
    %347 = vmatprep.subr.bf16.mxu0 %v184
    %348 = vmatpush1.bf16.msra.mxu0 %v183
    %349 = vmatprep.subr.bf16.mxu0 %v188
    %350 = vmatpush1.bf16.msra.mxu0 %v187
    %351 = vmatprep.subr.bf16.mxu0 %v192
    %352 = vmatpush1.bf16.msra.mxu0 %v191
    %353 = vmatprep.subr.bf16.mxu0 %v196
    %354 = vmatpush1.bf16.msra.mxu0 %v195
    %355 = vmatprep.subr.bf16.mxu0 %v200
    %356 = vmatpush1.bf16.msra.mxu0 %v199
    %357 = vmatprep.subr.bf16.mxu0 %v204
    %358 = vmatpush1.bf16.msra.mxu0 %v203
    %359 = vmatprep.subr.bf16.mxu0 %v208
    %360 = vmatpush1.bf16.msra.mxu0 %v207
    %361 = vmatprep.subr.bf16.mxu0 0
    %362 = vmatpush1.bf16.msra.mxu0 0
    %363 = vmatprep.subr.bf16.mxu0 0
    %364 = vmatpush1.bf16.msra.mxu0 0
    %365 = vmatprep.subr.bf16.mxu0 0
    %366 = vmatpush1.bf16.msra.mxu0 0
    %367 = vmatprep.subr.bf16.mxu0 0
    %368 = vmatpush1.bf16.msra.mxu0 0
    %369 = vmatprep.subr.bf16.mxu0 0
    %370 = vmatpush1.bf16.msra.mxu0 0
    %371 = vmatprep.subr.bf16.mxu0 0
    %372 = vmatpush1.bf16.msra.mxu0 0
    %373 = vmatprep.subr.bf16.mxu0 0
    %374 = vmatpush1.bf16.msra.mxu0 0
    %375 = vmatprep.subr.bf16.mxu0 0
    %376 = vmatpush1.bf16.msra.mxu0 0
    %377 = vmatprep.mubr.bf16.mxu0 0
    %378 = vmatmul.mubr.bf16.gmra.mrb[0].mxu0 %v344
    %v379 = vpop.f32.mrb[0].mxu0
    %v380 = vadd.f32 0.0, %v379
    %v381 = vpop.f32.mrb[0].mxu0
    %v382 = vadd.f32 0.0, %v381
    %v383 = vpop.f32.mrb[0].mxu0
    %v384 = vpop.f32.mrb[0].mxu0
    %385 = vdwg.mxu0
    %386 = vmatprep.subr.bf16.mxu0 %v182
    %387 = vmatpush1.bf16.msra.mxu0 %v181
    %388 = vmatprep.subr.bf16.mxu0 %v186
    %389 = vmatpush1.bf16.msra.mxu0 %v185
    %390 = vmatprep.subr.bf16.mxu0 %v190
    %391 = vmatpush1.bf16.msra.mxu0 %v189
    %392 = vmatprep.subr.bf16.mxu0 %v194
    %393 = vmatpush1.bf16.msra.mxu0 %v193
    %394 = vmatprep.subr.bf16.mxu0 %v198
    %395 = vmatpush1.bf16.msra.mxu0 %v197
    %396 = vmatprep.subr.bf16.mxu0 %v202
    %397 = vmatpush1.bf16.msra.mxu0 %v201
    %398 = vmatprep.subr.bf16.mxu0 %v206
    %399 = vmatpush1.bf16.msra.mxu0 %v205
    %400 = vmatprep.subr.bf16.mxu0 %v210
    %401 = vmatpush1.bf16.msra.mxu0 %v209
    %402 = vmatprep.subr.bf16.mxu0 0
    %403 = vmatpush1.bf16.msra.mxu0 0
    %404 = vmatprep.subr.bf16.mxu0 0
    %405 = vmatpush1.bf16.msra.mxu0 0
    %406 = vmatprep.subr.bf16.mxu0 0
    %407 = vmatpush1.bf16.msra.mxu0 0
    %408 = vmatprep.subr.bf16.mxu0 0
    %409 = vmatpush1.bf16.msra.mxu0 0
    %410 = vmatprep.subr.bf16.mxu0 0
    %411 = vmatpush1.bf16.msra.mxu0 0
    %412 = vmatprep.subr.bf16.mxu0 0
    %413 = vmatpush1.bf16.msra.mxu0 0
    %414 = vmatprep.subr.bf16.mxu0 0
    %415 = vmatpush1.bf16.msra.mxu0 0
    %416 = vmatprep.subr.bf16.mxu0 0
    %417 = vmatpush1.bf16.msra.mxu0 0
    %418 = vmatprep.mubr.bf16.mxu0 0
    %419 = vmatmul.mubr.bf16.gmra.mrb[0].mxu0 %v344
    %v420 = vpop.f32.mrb[0].mxu0
    %v421 = vadd.f32 0.0, %v420
    %v422 = vpop.f32.mrb[0].mxu0
    %v423 = vadd.f32 0.0, %v422
    %v424 = vpop.f32.mrb[0].mxu0
    %v425 = vpop.f32.mrb[0].mxu0
    %426 = vdwg.mxu0
    %v431 = vrot.slane %v380, 7
    %v432 = vrot.slane %v382, 7
    %v433 = vrot.slane %v421, 7
    %v434 = vrot.slane %v423, 7
    %v439 = vadd.f32 %v46, %v431
    %v440 = vadd.f32 %v47, %v432
    %v441 = vadd.f32 %v48, %v433
    %v442 = vadd.f32 %v49, %v434
    %v443 = vtanh.pop %v439
    %v444 = vtanh.pop %v440
    %v445 = vtanh.pop %v441
    %v446 = vtanh.pop %v442
    %v447 = vmul.f32 %v443, 0.5
    %v448 = vmul.f32 %v444, 0.5
    %v449 = vmul.f32 %v445, 0.5
    %v450 = vadd.f32 %v447, 0.5
    %v451 = vadd.f32 %v448, 0.5
    %v452 = vadd.f32 %v449, 0.5
    %v454 = vrot.slane %v341, 7
    %v456 = vmul.f32 %v451, %v454
    %v457 = vmul.f32 %v450, %v446
    %v458 = vadd.f32 %v456, %v457
    %v459 = vtanh.pop %v458
    %v460 = vmul.f32 %v452, %v459
    %v461 = vpack.c.bf16 %v460, %v460
    %v463 = vshrl.u32 %v461, 16
    %466 = vmatprep.subr.bf16.mxu0 %v180
    %467 = vmatpush1.bf16.msra.mxu0 %v179
    %468 = vmatprep.subr.bf16.mxu0 %v184
    %469 = vmatpush1.bf16.msra.mxu0 %v183
    %470 = vmatprep.subr.bf16.mxu0 %v188
    %471 = vmatpush1.bf16.msra.mxu0 %v187
    %472 = vmatprep.subr.bf16.mxu0 %v192
    %473 = vmatpush1.bf16.msra.mxu0 %v191
    %474 = vmatprep.subr.bf16.mxu0 %v196
    %475 = vmatpush1.bf16.msra.mxu0 %v195
    %476 = vmatprep.subr.bf16.mxu0 %v200
    %477 = vmatpush1.bf16.msra.mxu0 %v199
    %478 = vmatprep.subr.bf16.mxu0 %v204
    %479 = vmatpush1.bf16.msra.mxu0 %v203
    %480 = vmatprep.subr.bf16.mxu0 %v208
    %481 = vmatpush1.bf16.msra.mxu0 %v207
    %482 = vmatprep.subr.bf16.mxu0 0
    %483 = vmatpush1.bf16.msra.mxu0 0
    %484 = vmatprep.subr.bf16.mxu0 0
    %485 = vmatpush1.bf16.msra.mxu0 0
    %486 = vmatprep.subr.bf16.mxu0 0
    %487 = vmatpush1.bf16.msra.mxu0 0
    %488 = vmatprep.subr.bf16.mxu0 0
    %489 = vmatpush1.bf16.msra.mxu0 0
    %490 = vmatprep.subr.bf16.mxu0 0
    %491 = vmatpush1.bf16.msra.mxu0 0
    %492 = vmatprep.subr.bf16.mxu0 0
    %493 = vmatpush1.bf16.msra.mxu0 0
    %494 = vmatprep.subr.bf16.mxu0 0
    %495 = vmatpush1.bf16.msra.mxu0 0
    %496 = vmatprep.subr.bf16.mxu0 0
    %497 = vmatpush1.bf16.msra.mxu0 0
    %498 = vmatprep.mubr.bf16.mxu0 0
    %499 = vmatmul.mubr.bf16.gmra.mrb[0].mxu0 %v463
    %v500 = vpop.f32.mrb[0].mxu0
    %v501 = vadd.f32 0.0, %v500
    %v502 = vpop.f32.mrb[0].mxu0
    %v503 = vadd.f32 0.0, %v502
    %v504 = vpop.f32.mrb[0].mxu0
    %v505 = vpop.f32.mrb[0].mxu0
    %506 = vdwg.mxu0
    %507 = vmatprep.subr.bf16.mxu0 %v182
    %508 = vmatpush1.bf16.msra.mxu0 %v181
    %509 = vmatprep.subr.bf16.mxu0 %v186
    %510 = vmatpush1.bf16.msra.mxu0 %v185
    %511 = vmatprep.subr.bf16.mxu0 %v190
    %512 = vmatpush1.bf16.msra.mxu0 %v189
    %513 = vmatprep.subr.bf16.mxu0 %v194
    %514 = vmatpush1.bf16.msra.mxu0 %v193
    %515 = vmatprep.subr.bf16.mxu0 %v198
    %516 = vmatpush1.bf16.msra.mxu0 %v197
    %517 = vmatprep.subr.bf16.mxu0 %v202
    %518 = vmatpush1.bf16.msra.mxu0 %v201
    %519 = vmatprep.subr.bf16.mxu0 %v206
    %520 = vmatpush1.bf16.msra.mxu0 %v205
    %521 = vmatprep.subr.bf16.mxu0 %v210
    %522 = vmatpush1.bf16.msra.mxu0 %v209
    %523 = vmatprep.subr.bf16.mxu0 0
    %524 = vmatpush1.bf16.msra.mxu0 0
    %525 = vmatprep.subr.bf16.mxu0 0
    %526 = vmatpush1.bf16.msra.mxu0 0
    %527 = vmatprep.subr.bf16.mxu0 0
    %528 = vmatpush1.bf16.msra.mxu0 0
    %529 = vmatprep.subr.bf16.mxu0 0
    %530 = vmatpush1.bf16.msra.mxu0 0
    %531 = vmatprep.subr.bf16.mxu0 0
    %532 = vmatpush1.bf16.msra.mxu0 0
    %533 = vmatprep.subr.bf16.mxu0 0
    %534 = vmatpush1.bf16.msra.mxu0 0
    %535 = vmatprep.subr.bf16.mxu0 0
    %536 = vmatpush1.bf16.msra.mxu0 0
    %537 = vmatprep.subr.bf16.mxu0 0
    %538 = vmatpush1.bf16.msra.mxu0 0
    %539 = vmatprep.mubr.bf16.mxu0 0
    %540 = vmatmul.mubr.bf16.gmra.mrb[0].mxu0 %v463
    %v541 = vpop.f32.mrb[0].mxu0
    %v542 = vadd.f32 0.0, %v541
    %v543 = vpop.f32.mrb[0].mxu0
    %v544 = vadd.f32 0.0, %v543
    %v545 = vpop.f32.mrb[0].mxu0
    %v546 = vpop.f32.mrb[0].mxu0
    %547 = vdwg.mxu0
    %v552 = vrot.slane %v501, 6
    %v553 = vrot.slane %v503, 6
    %v554 = vrot.slane %v542, 6
    %v555 = vrot.slane %v544, 6
    %v560 = vadd.f32 %v46, %v552
    %v561 = vadd.f32 %v47, %v553
    %v562 = vadd.f32 %v48, %v554
    %v563 = vadd.f32 %v49, %v555
    %v564 = vtanh.pop %v560
    %v565 = vtanh.pop %v561
    %v566 = vtanh.pop %v562
    %v567 = vtanh.pop %v563
    %v568 = vmul.f32 %v564, 0.5
    %v569 = vmul.f32 %v565, 0.5
    %v570 = vmul.f32 %v566, 0.5
    %v571 = vadd.f32 %v568, 0.5
    %v572 = vadd.f32 %v569, 0.5
    %v573 = vadd.f32 %v570, 0.5
    %v575 = vrot.slane %v458, 7
    %v577 = vmul.f32 %v572, %v575
    %v578 = vmul.f32 %v571, %v567
    %v579 = vadd.f32 %v577, %v578
    %v580 = vtanh.pop %v579
    %v581 = vmul.f32 %v573, %v580
    %v582 = vpack.c.bf16 %v581, %v581
    %v584 = vrot.slane %v582, 1
    %586 = vmatprep.subr.bf16.mxu0 %v180
    %587 = vmatpush1.bf16.msra.mxu0 %v179
    %588 = vmatprep.subr.bf16.mxu0 %v184
    %589 = vmatpush1.bf16.msra.mxu0 %v183
    %590 = vmatprep.subr.bf16.mxu0 %v188
    %591 = vmatpush1.bf16.msra.mxu0 %v187
    %592 = vmatprep.subr.bf16.mxu0 %v192
    %593 = vmatpush1.bf16.msra.mxu0 %v191
    %594 = vmatprep.subr.bf16.mxu0 %v196
    %595 = vmatpush1.bf16.msra.mxu0 %v195
    %596 = vmatprep.subr.bf16.mxu0 %v200
    %597 = vmatpush1.bf16.msra.mxu0 %v199
    %598 = vmatprep.subr.bf16.mxu0 %v204
    %599 = vmatpush1.bf16.msra.mxu0 %v203
    %600 = vmatprep.subr.bf16.mxu0 %v208
    %601 = vmatpush1.bf16.msra.mxu0 %v207
    %602 = vmatprep.subr.bf16.mxu0 0
    %603 = vmatpush1.bf16.msra.mxu0 0
    %604 = vmatprep.subr.bf16.mxu0 0
    %605 = vmatpush1.bf16.msra.mxu0 0
    %606 = vmatprep.subr.bf16.mxu0 0
    %607 = vmatpush1.bf16.msra.mxu0 0
    %608 = vmatprep.subr.bf16.mxu0 0
    %609 = vmatpush1.bf16.msra.mxu0 0
    %610 = vmatprep.subr.bf16.mxu0 0
    %611 = vmatpush1.bf16.msra.mxu0 0
    %612 = vmatprep.subr.bf16.mxu0 0
    %613 = vmatpush1.bf16.msra.mxu0 0
    %614 = vmatprep.subr.bf16.mxu0 0
    %615 = vmatpush1.bf16.msra.mxu0 0
    %616 = vmatprep.subr.bf16.mxu0 0
    %617 = vmatpush1.bf16.msra.mxu0 0
    %618 = vmatprep.mubr.bf16.mxu0 0
    %619 = vmatmul.mubr.bf16.gmra.mrb[0].mxu0 %v584
    %v620 = vpop.f32.mrb[0].mxu0
    %v621 = vadd.f32 0.0, %v620
    %v622 = vpop.f32.mrb[0].mxu0
    %v623 = vadd.f32 0.0, %v622
    %v624 = vpop.f32.mrb[0].mxu0
    %v625 = vpop.f32.mrb[0].mxu0
    %626 = vdwg.mxu0
    %627 = vmatprep.subr.bf16.mxu0 %v182
    %628 = vmatpush1.bf16.msra.mxu0 %v181
    %629 = vmatprep.subr.bf16.mxu0 %v186
    %630 = vmatpush1.bf16.msra.mxu0 %v185
    %631 = vmatprep.subr.bf16.mxu0 %v190
    %632 = vmatpush1.bf16.msra.mxu0 %v189
    %633 = vmatprep.subr.bf16.mxu0 %v194
    %634 = vmatpush1.bf16.msra.mxu0 %v193
    %635 = vmatprep.subr.bf16.mxu0 %v198
    %636 = vmatpush1.bf16.msra.mxu0 %v197
    %637 = vmatprep.subr.bf16.mxu0 %v202
    %638 = vmatpush1.bf16.msra.mxu0 %v201
    %639 = vmatprep.subr.bf16.mxu0 %v206
    %640 = vmatpush1.bf16.msra.mxu0 %v205
    %641 = vmatprep.subr.bf16.mxu0 %v210
    %642 = vmatpush1.bf16.msra.mxu0 %v209
    %643 = vmatprep.subr.bf16.mxu0 0
    %644 = vmatpush1.bf16.msra.mxu0 0
    %645 = vmatprep.subr.bf16.mxu0 0
    %646 = vmatpush1.bf16.msra.mxu0 0
    %647 = vmatprep.subr.bf16.mxu0 0
    %648 = vmatpush1.bf16.msra.mxu0 0
    %649 = vmatprep.subr.bf16.mxu0 0
    %650 = vmatpush1.bf16.msra.mxu0 0
    %651 = vmatprep.subr.bf16.mxu0 0
    %652 = vmatpush1.bf16.msra.mxu0 0
    %653 = vmatprep.subr.bf16.mxu0 0
    %654 = vmatpush1.bf16.msra.mxu0 0
    %655 = vmatprep.subr.bf16.mxu0 0
    %656 = vmatpush1.bf16.msra.mxu0 0
    %657 = vmatprep.subr.bf16.mxu0 0
    %658 = vmatpush1.bf16.msra.mxu0 0
    %659 = vmatprep.mubr.bf16.mxu0 0
    %660 = vmatmul.mubr.bf16.gmra.mrb[0].mxu0 %v584
    %v661 = vpop.f32.mrb[0].mxu0
    %v662 = vadd.f32 0.0, %v661
    %v663 = vpop.f32.mrb[0].mxu0
    %v664 = vadd.f32 0.0, %v663
    %v665 = vpop.f32.mrb[0].mxu0
    %v666 = vpop.f32.mrb[0].mxu0
    %667 = vdwg.mxu0
    %v672 = vrot.slane %v621, 5
    %v673 = vrot.slane %v623, 5
    %v674 = vrot.slane %v662, 5
    %v675 = vrot.slane %v664, 5
    %v680 = vadd.f32 %v46, %v672
    %v681 = vadd.f32 %v47, %v673
    %v682 = vadd.f32 %v48, %v674
    %v683 = vadd.f32 %v49, %v675
    %v684 = vtanh.pop %v680
    %v685 = vtanh.pop %v681
    %v686 = vtanh.pop %v682
    %v687 = vtanh.pop %v683
    %v688 = vmul.f32 %v684, 0.5
    %v689 = vmul.f32 %v685, 0.5
    %v690 = vmul.f32 %v686, 0.5
    %v691 = vadd.f32 %v688, 0.5
    %v692 = vadd.f32 %v689, 0.5
    %v693 = vadd.f32 %v690, 0.5
    %v695 = vrot.slane %v579, 7
    %v697 = vmul.f32 %v692, %v695
    %v698 = vmul.f32 %v691, %v687
    %v699 = vadd.f32 %v697, %v698
    %v700 = vtanh.pop %v699
    %v701 = vmul.f32 %v693, %v700
    %v702 = vpack.c.bf16 %v701, %v701
    %v704 = vshrl.u32 %v702, 16
    %v706 = vrot.slane %v704, 1
    %708 = vmatprep.subr.bf16.mxu0 %v180
    %709 = vmatpush1.bf16.msra.mxu0 %v179
    %710 = vmatprep.subr.bf16.mxu0 %v184
    %711 = vmatpush1.bf16.msra.mxu0 %v183
    %712 = vmatprep.subr.bf16.mxu0 %v188
    %713 = vmatpush1.bf16.msra.mxu0 %v187
    %714 = vmatprep.subr.bf16.mxu0 %v192
    %715 = vmatpush1.bf16.msra.mxu0 %v191
    %716 = vmatprep.subr.bf16.mxu0 %v196
    %717 = vmatpush1.bf16.msra.mxu0 %v195
    %718 = vmatprep.subr.bf16.mxu0 %v200
    %719 = vmatpush1.bf16.msra.mxu0 %v199
    %720 = vmatprep.subr.bf16.mxu0 %v204
    %721 = vmatpush1.bf16.msra.mxu0 %v203
    %722 = vmatprep.subr.bf16.mxu0 %v208
    %723 = vmatpush1.bf16.msra.mxu0 %v207
    %724 = vmatprep.subr.bf16.mxu0 0
    %725 = vmatpush1.bf16.msra.mxu0 0
    %726 = vmatprep.subr.bf16.mxu0 0
    %727 = vmatpush1.bf16.msra.mxu0 0
    %728 = vmatprep.subr.bf16.mxu0 0
    %729 = vmatpush1.bf16.msra.mxu0 0
    %730 = vmatprep.subr.bf16.mxu0 0
    %731 = vmatpush1.bf16.msra.mxu0 0
    %732 = vmatprep.subr.bf16.mxu0 0
    %733 = vmatpush1.bf16.msra.mxu0 0
    %734 = vmatprep.subr.bf16.mxu0 0
    %735 = vmatpush1.bf16.msra.mxu0 0
    %736 = vmatprep.subr.bf16.mxu0 0
    %737 = vmatpush1.bf16.msra.mxu0 0
    %738 = vmatprep.subr.bf16.mxu0 0
    %739 = vmatpush1.bf16.msra.mxu0 0
    %740 = vmatprep.mubr.bf16.mxu0 0
    %741 = vmatmul.mubr.bf16.gmra.mrb[0].mxu0 %v706
    %v742 = vpop.f32.mrb[0].mxu0
    %v743 = vadd.f32 0.0, %v742
    %v744 = vpop.f32.mrb[0].mxu0
    %v745 = vadd.f32 0.0, %v744
    %v746 = vpop.f32.mrb[0].mxu0
    %v747 = vpop.f32.mrb[0].mxu0
    %748 = vdwg.mxu0
    %749 = vmatprep.subr.bf16.mxu0 %v182
    %750 = vmatpush1.bf16.msra.mxu0 %v181
    %751 = vmatprep.subr.bf16.mxu0 %v186
    %752 = vmatpush1.bf16.msra.mxu0 %v185
    %753 = vmatprep.subr.bf16.mxu0 %v190
    %754 = vmatpush1.bf16.msra.mxu0 %v189
    %755 = vmatprep.subr.bf16.mxu0 %v194
    %756 = vmatpush1.bf16.msra.mxu0 %v193
    %757 = vmatprep.subr.bf16.mxu0 %v198
    %758 = vmatpush1.bf16.msra.mxu0 %v197
    %759 = vmatprep.subr.bf16.mxu0 %v202
    %760 = vmatpush1.bf16.msra.mxu0 %v201
    %761 = vmatprep.subr.bf16.mxu0 %v206
    %762 = vmatpush1.bf16.msra.mxu0 %v205
    %763 = vmatprep.subr.bf16.mxu0 %v210
    %764 = vmatpush1.bf16.msra.mxu0 %v209
    %765 = vmatprep.subr.bf16.mxu0 0
    %766 = vmatpush1.bf16.msra.mxu0 0
    %767 = vmatprep.subr.bf16.mxu0 0
    %768 = vmatpush1.bf16.msra.mxu0 0
    %769 = vmatprep.subr.bf16.mxu0 0
    %770 = vmatpush1.bf16.msra.mxu0 0
    %771 = vmatprep.subr.bf16.mxu0 0
    %772 = vmatpush1.bf16.msra.mxu0 0
    %773 = vmatprep.subr.bf16.mxu0 0
    %774 = vmatpush1.bf16.msra.mxu0 0
    %775 = vmatprep.subr.bf16.mxu0 0
    %776 = vmatpush1.bf16.msra.mxu0 0
    %777 = vmatprep.subr.bf16.mxu0 0
    %778 = vmatpush1.bf16.msra.mxu0 0
    %779 = vmatprep.subr.bf16.mxu0 0
    %780 = vmatpush1.bf16.msra.mxu0 0
    %781 = vmatprep.mubr.bf16.mxu0 0
    %782 = vmatmul.mubr.bf16.gmra.mrb[0].mxu0 %v706
    %v783 = vpop.f32.mrb[0].mxu0
    %v784 = vadd.f32 0.0, %v783
    %v785 = vpop.f32.mrb[0].mxu0
    %v786 = vadd.f32 0.0, %v785
    %v787 = vpop.f32.mrb[0].mxu0
    %v788 = vpop.f32.mrb[0].mxu0
    %789 = vdwg.mxu0
    %v794 = vrot.slane %v743, 4
    %v795 = vrot.slane %v745, 4
    %v796 = vrot.slane %v784, 4
    %v797 = vrot.slane %v786, 4
    %v802 = vadd.f32 %v46, %v794
    %v803 = vadd.f32 %v47, %v795
    %v804 = vadd.f32 %v48, %v796
    %v805 = vadd.f32 %v49, %v797
    %v806 = vtanh.pop %v802
    %v807 = vtanh.pop %v803
    %v808 = vtanh.pop %v804
    %v809 = vtanh.pop %v805
    %v810 = vmul.f32 %v806, 0.5
    %v811 = vmul.f32 %v807, 0.5
    %v812 = vmul.f32 %v808, 0.5
    %v813 = vadd.f32 %v810, 0.5
    %v814 = vadd.f32 %v811, 0.5
    %v815 = vadd.f32 %v812, 0.5
    %v817 = vrot.slane %v699, 7
    %v819 = vmul.f32 %v814, %v817
    %v820 = vmul.f32 %v813, %v809
    %v821 = vadd.f32 %v819, %v820
    %v822 = vtanh.pop %v821
    %v823 = vmul.f32 %v815, %v822
    %v824 = vpack.c.bf16 %v823, %v823
    %v826 = vrot.slane %v824, 2
    %828 = vmatprep.subr.bf16.mxu0 %v180
    %829 = vmatpush1.bf16.msra.mxu0 %v179
    %830 = vmatprep.subr.bf16.mxu0 %v184
    %831 = vmatpush1.bf16.msra.mxu0 %v183
    %832 = vmatprep.subr.bf16.mxu0 %v188
    %833 = vmatpush1.bf16.msra.mxu0 %v187
    %834 = vmatprep.subr.bf16.mxu0 %v192
    %835 = vmatpush1.bf16.msra.mxu0 %v191
    %836 = vmatprep.subr.bf16.mxu0 %v196
    %837 = vmatpush1.bf16.msra.mxu0 %v195
    %838 = vmatprep.subr.bf16.mxu0 %v200
    %839 = vmatpush1.bf16.msra.mxu0 %v199
    %840 = vmatprep.subr.bf16.mxu0 %v204
    %841 = vmatpush1.bf16.msra.mxu0 %v203
    %842 = vmatprep.subr.bf16.mxu0 %v208
    %843 = vmatpush1.bf16.msra.mxu0 %v207
    %844 = vmatprep.subr.bf16.mxu0 0
    %845 = vmatpush1.bf16.msra.mxu0 0
    %846 = vmatprep.subr.bf16.mxu0 0
    %847 = vmatpush1.bf16.msra.mxu0 0
    %848 = vmatprep.subr.bf16.mxu0 0
    %849 = vmatpush1.bf16.msra.mxu0 0
    %850 = vmatprep.subr.bf16.mxu0 0
    %851 = vmatpush1.bf16.msra.mxu0 0
    %852 = vmatprep.subr.bf16.mxu0 0
    %853 = vmatpush1.bf16.msra.mxu0 0
    %854 = vmatprep.subr.bf16.mxu0 0
    %855 = vmatpush1.bf16.msra.mxu0 0
    %856 = vmatprep.subr.bf16.mxu0 0
    %857 = vmatpush1.bf16.msra.mxu0 0
    %858 = vmatprep.subr.bf16.mxu0 0
    %859 = vmatpush1.bf16.msra.mxu0 0
    %860 = vmatprep.mubr.bf16.mxu0 0
    %861 = vmatmul.mubr.bf16.gmra.mrb[0].mxu0 %v826
    %v862 = vpop.f32.mrb[0].mxu0
    %v863 = vadd.f32 0.0, %v862
    %v864 = vpop.f32.mrb[0].mxu0
    %v865 = vadd.f32 0.0, %v864
    %v866 = vpop.f32.mrb[0].mxu0
    %v867 = vpop.f32.mrb[0].mxu0
    %868 = vdwg.mxu0
    %869 = vmatprep.subr.bf16.mxu0 %v182
    %870 = vmatpush1.bf16.msra.mxu0 %v181
    %871 = vmatprep.subr.bf16.mxu0 %v186
    %872 = vmatpush1.bf16.msra.mxu0 %v185
    %873 = vmatprep.subr.bf16.mxu0 %v190
    %874 = vmatpush1.bf16.msra.mxu0 %v189
    %875 = vmatprep.subr.bf16.mxu0 %v194
    %876 = vmatpush1.bf16.msra.mxu0 %v193
    %877 = vmatprep.subr.bf16.mxu0 %v198
    %878 = vmatpush1.bf16.msra.mxu0 %v197
    %879 = vmatprep.subr.bf16.mxu0 %v202
    %880 = vmatpush1.bf16.msra.mxu0 %v201
    %881 = vmatprep.subr.bf16.mxu0 %v206
    %882 = vmatpush1.bf16.msra.mxu0 %v205
    %883 = vmatprep.subr.bf16.mxu0 %v210
    %884 = vmatpush1.bf16.msra.mxu0 %v209
    %885 = vmatprep.subr.bf16.mxu0 0
    %886 = vmatpush1.bf16.msra.mxu0 0
    %887 = vmatprep.subr.bf16.mxu0 0
    %888 = vmatpush1.bf16.msra.mxu0 0
    %889 = vmatprep.subr.bf16.mxu0 0
    %890 = vmatpush1.bf16.msra.mxu0 0
    %891 = vmatprep.subr.bf16.mxu0 0
    %892 = vmatpush1.bf16.msra.mxu0 0
    %893 = vmatprep.subr.bf16.mxu0 0
    %894 = vmatpush1.bf16.msra.mxu0 0
    %895 = vmatprep.subr.bf16.mxu0 0
    %896 = vmatpush1.bf16.msra.mxu0 0
    %897 = vmatprep.subr.bf16.mxu0 0
    %898 = vmatpush1.bf16.msra.mxu0 0
    %899 = vmatprep.subr.bf16.mxu0 0
    %900 = vmatpush1.bf16.msra.mxu0 0
    %901 = vmatprep.mubr.bf16.mxu0 0
    %902 = vmatmul.mubr.bf16.gmra.mrb[0].mxu0 %v826
    %v903 = vpop.f32.mrb[0].mxu0
    %v904 = vadd.f32 0.0, %v903
    %v905 = vpop.f32.mrb[0].mxu0
    %v906 = vadd.f32 0.0, %v905
    %v907 = vpop.f32.mrb[0].mxu0
    %v908 = vpop.f32.mrb[0].mxu0
    %909 = vdwg.mxu0
    %v914 = vrot.slane %v863, 3
    %v915 = vrot.slane %v865, 3
    %v916 = vrot.slane %v904, 3
    %v917 = vrot.slane %v906, 3
    %v922 = vadd.f32 %v46, %v914
    %v923 = vadd.f32 %v47, %v915
    %v924 = vadd.f32 %v48, %v916
    %v925 = vadd.f32 %v49, %v917
    %v926 = vtanh.pop %v922
    %v927 = vtanh.pop %v923
    %v928 = vtanh.pop %v924
    %v929 = vtanh.pop %v925
    %v930 = vmul.f32 %v926, 0.5
    %v931 = vmul.f32 %v927, 0.5
    %v932 = vmul.f32 %v928, 0.5
    %v933 = vadd.f32 %v930, 0.5
    %v934 = vadd.f32 %v931, 0.5
    %v935 = vadd.f32 %v932, 0.5
    %v937 = vrot.slane %v821, 7
    %v939 = vmul.f32 %v934, %v937
    %v940 = vmul.f32 %v933, %v929
    %v941 = vadd.f32 %v939, %v940
    %v942 = vtanh.pop %v941
    %v943 = vmul.f32 %v935, %v942
    %v944 = vpack.c.bf16 %v943, %v943
    %v946 = vshrl.u32 %v944, 16
    %v948 = vrot.slane %v946, 2
    %950 = vmatprep.subr.bf16.mxu0 %v180
    %951 = vmatpush1.bf16.msra.mxu0 %v179
    %952 = vmatprep.subr.bf16.mxu0 %v184
    %953 = vmatpush1.bf16.msra.mxu0 %v183
    %954 = vmatprep.subr.bf16.mxu0 %v188
    %955 = vmatpush1.bf16.msra.mxu0 %v187
    %956 = vmatprep.subr.bf16.mxu0 %v192
    %957 = vmatpush1.bf16.msra.mxu0 %v191
    %958 = vmatprep.subr.bf16.mxu0 %v196
    %959 = vmatpush1.bf16.msra.mxu0 %v195
    %960 = vmatprep.subr.bf16.mxu0 %v200
    %961 = vmatpush1.bf16.msra.mxu0 %v199
    %962 = vmatprep.subr.bf16.mxu0 %v204
    %963 = vmatpush1.bf16.msra.mxu0 %v203
    %964 = vmatprep.subr.bf16.mxu0 %v208
    %965 = vmatpush1.bf16.msra.mxu0 %v207
    %966 = vmatprep.subr.bf16.mxu0 0
    %967 = vmatpush1.bf16.msra.mxu0 0
    %968 = vmatprep.subr.bf16.mxu0 0
    %969 = vmatpush1.bf16.msra.mxu0 0
    %970 = vmatprep.subr.bf16.mxu0 0
    %971 = vmatpush1.bf16.msra.mxu0 0
    %972 = vmatprep.subr.bf16.mxu0 0
    %973 = vmatpush1.bf16.msra.mxu0 0
    %974 = vmatprep.subr.bf16.mxu0 0
    %975 = vmatpush1.bf16.msra.mxu0 0
    %976 = vmatprep.subr.bf16.mxu0 0
    %977 = vmatpush1.bf16.msra.mxu0 0
    %978 = vmatprep.subr.bf16.mxu0 0
    %979 = vmatpush1.bf16.msra.mxu0 0
    %980 = vmatprep.subr.bf16.mxu0 0
    %981 = vmatpush1.bf16.msra.mxu0 0
    %982 = vmatprep.mubr.bf16.mxu0 0
    %983 = vmatmul.mubr.bf16.gmra.mrb[0].mxu0 %v948
    %v984 = vpop.f32.mrb[0].mxu0
    %v985 = vadd.f32 0.0, %v984
    %v986 = vpop.f32.mrb[0].mxu0
    %v987 = vadd.f32 0.0, %v986
    %v988 = vpop.f32.mrb[0].mxu0
    %v989 = vpop.f32.mrb[0].mxu0
    %990 = vdwg.mxu0
    %991 = vmatprep.subr.bf16.mxu0 %v182
    %992 = vmatpush1.bf16.msra.mxu0 %v181
    %993 = vmatprep.subr.bf16.mxu0 %v186
    %994 = vmatpush1.bf16.msra.mxu0 %v185
    %995 = vmatprep.subr.bf16.mxu0 %v190
    %996 = vmatpush1.bf16.msra.mxu0 %v189
    %997 = vmatprep.subr.bf16.mxu0 %v194
    %998 = vmatpush1.bf16.msra.mxu0 %v193
    %999 = vmatprep.subr.bf16.mxu0 %v198
    %1000 = vmatpush1.bf16.msra.mxu0 %v197
    %1001 = vmatprep.subr.bf16.mxu0 %v202
    %1002 = vmatpush1.bf16.msra.mxu0 %v201
    %1003 = vmatprep.subr.bf16.mxu0 %v206
    %1004 = vmatpush1.bf16.msra.mxu0 %v205
    %1005 = vmatprep.subr.bf16.mxu0 %v210
    %1006 = vmatpush1.bf16.msra.mxu0 %v209
    %1007 = vmatprep.subr.bf16.mxu0 0
    %1008 = vmatpush1.bf16.msra.mxu0 0
    %1009 = vmatprep.subr.bf16.mxu0 0
    %1010 = vmatpush1.bf16.msra.mxu0 0
    %1011 = vmatprep.subr.bf16.mxu0 0
    %1012 = vmatpush1.bf16.msra.mxu0 0
    %1013 = vmatprep.subr.bf16.mxu0 0
    %1014 = vmatpush1.bf16.msra.mxu0 0
    %1015 = vmatprep.subr.bf16.mxu0 0
    %1016 = vmatpush1.bf16.msra.mxu0 0
    %1017 = vmatprep.subr.bf16.mxu0 0
    %1018 = vmatpush1.bf16.msra.mxu0 0
    %1019 = vmatprep.subr.bf16.mxu0 0
    %1020 = vmatpush1.bf16.msra.mxu0 0
    %1021 = vmatprep.subr.bf16.mxu0 0
    %1022 = vmatpush1.bf16.msra.mxu0 0
    %1023 = vmatprep.mubr.bf16.mxu0 0
    %1024 = vmatmul.mubr.bf16.gmra.mrb[0].mxu0 %v948
    %v1025 = vpop.f32.mrb[0].mxu0
    %v1026 = vadd.f32 0.0, %v1025
    %v1027 = vpop.f32.mrb[0].mxu0
    %v1028 = vadd.f32 0.0, %v1027
    %v1029 = vpop.f32.mrb[0].mxu0
    %v1030 = vpop.f32.mrb[0].mxu0
    %1031 = vdwg.mxu0
    %v1036 = vrot.slane %v985, 2
    %v1037 = vrot.slane %v987, 2
    %v1038 = vrot.slane %v1026, 2
    %v1039 = vrot.slane %v1028, 2
    %v1044 = vadd.f32 %v46, %v1036
    %v1045 = vadd.f32 %v47, %v1037
    %v1046 = vadd.f32 %v48, %v1038
    %v1047 = vadd.f32 %v49, %v1039
    %v1048 = vtanh.pop %v1044
    %v1049 = vtanh.pop %v1045
    %v1050 = vtanh.pop %v1046
    %v1051 = vtanh.pop %v1047
    %v1052 = vmul.f32 %v1048, 0.5
    %v1053 = vmul.f32 %v1049, 0.5
    %v1054 = vmul.f32 %v1050, 0.5
    %v1055 = vadd.f32 %v1052, 0.5
    %v1056 = vadd.f32 %v1053, 0.5
    %v1057 = vadd.f32 %v1054, 0.5
    %v1059 = vrot.slane %v941, 7
    %v1061 = vmul.f32 %v1056, %v1059
    %v1062 = vmul.f32 %v1055, %v1051
    %v1063 = vadd.f32 %v1061, %v1062
    %v1064 = vtanh.pop %v1063
    %v1065 = vmul.f32 %v1057, %v1064
    %v1066 = vpack.c.bf16 %v1065, %v1065
    %v1068 = vrot.slane %v1066, 3
    %1070 = vmatprep.subr.bf16.mxu0 %v180
    %1071 = vmatpush1.bf16.msra.mxu0 %v179
    %1072 = vmatprep.subr.bf16.mxu0 %v184
    %1073 = vmatpush1.bf16.msra.mxu0 %v183
    %1074 = vmatprep.subr.bf16.mxu0 %v188
    %1075 = vmatpush1.bf16.msra.mxu0 %v187
    %1076 = vmatprep.subr.bf16.mxu0 %v192
    %1077 = vmatpush1.bf16.msra.mxu0 %v191
    %1078 = vmatprep.subr.bf16.mxu0 %v196
    %1079 = vmatpush1.bf16.msra.mxu0 %v195
    %1080 = vmatprep.subr.bf16.mxu0 %v200
    %1081 = vmatpush1.bf16.msra.mxu0 %v199
    %1082 = vmatprep.subr.bf16.mxu0 %v204
    %1083 = vmatpush1.bf16.msra.mxu0 %v203
    %1084 = vmatprep.subr.bf16.mxu0 %v208
    %1085 = vmatpush1.bf16.msra.mxu0 %v207
    %1086 = vmatprep.subr.bf16.mxu0 0
    %1087 = vmatpush1.bf16.msra.mxu0 0
    %1088 = vmatprep.subr.bf16.mxu0 0
    %1089 = vmatpush1.bf16.msra.mxu0 0
    %1090 = vmatprep.subr.bf16.mxu0 0
    %1091 = vmatpush1.bf16.msra.mxu0 0
    %1092 = vmatprep.subr.bf16.mxu0 0
    %1093 = vmatpush1.bf16.msra.mxu0 0
    %1094 = vmatprep.subr.bf16.mxu0 0
    %1095 = vmatpush1.bf16.msra.mxu0 0
    %1096 = vmatprep.subr.bf16.mxu0 0
    %1097 = vmatpush1.bf16.msra.mxu0 0
    %1098 = vmatprep.subr.bf16.mxu0 0
    %1099 = vmatpush1.bf16.msra.mxu0 0
    %1100 = vmatprep.subr.bf16.mxu0 0
    %1101 = vmatpush1.bf16.msra.mxu0 0
    %1102 = vmatprep.mubr.bf16.mxu0 0
    %1103 = vmatmul.mubr.bf16.gmra.mrb[0].mxu0 %v1068
    %v1104 = vpop.f32.mrb[0].mxu0
    %v1105 = vadd.f32 0.0, %v1104
    %v1106 = vpop.f32.mrb[0].mxu0
    %v1107 = vadd.f32 0.0, %v1106
    %v1108 = vpop.f32.mrb[0].mxu0
    %v1109 = vpop.f32.mrb[0].mxu0
    %1110 = vdwg.mxu0
    %1111 = vmatprep.subr.bf16.mxu0 %v182
    %1112 = vmatpush1.bf16.msra.mxu0 %v181
    %1113 = vmatprep.subr.bf16.mxu0 %v186
    %1114 = vmatpush1.bf16.msra.mxu0 %v185
    %1115 = vmatprep.subr.bf16.mxu0 %v190
    %1116 = vmatpush1.bf16.msra.mxu0 %v189
    %1117 = vmatprep.subr.bf16.mxu0 %v194
    %1118 = vmatpush1.bf16.msra.mxu0 %v193
    %1119 = vmatprep.subr.bf16.mxu0 %v198
    %1120 = vmatpush1.bf16.msra.mxu0 %v197
    %1121 = vmatprep.subr.bf16.mxu0 %v202
    %1122 = vmatpush1.bf16.msra.mxu0 %v201
    %1123 = vmatprep.subr.bf16.mxu0 %v206
    %1124 = vmatpush1.bf16.msra.mxu0 %v205
    %1125 = vmatprep.subr.bf16.mxu0 %v210
    %1126 = vmatpush1.bf16.msra.mxu0 %v209
    %1127 = vmatprep.subr.bf16.mxu0 0
    %1128 = vmatpush1.bf16.msra.mxu0 0
    %1129 = vmatprep.subr.bf16.mxu0 0
    %1130 = vmatpush1.bf16.msra.mxu0 0
    %1131 = vmatprep.subr.bf16.mxu0 0
    %1132 = vmatpush1.bf16.msra.mxu0 0
    %1133 = vmatprep.subr.bf16.mxu0 0
    %1134 = vmatpush1.bf16.msra.mxu0 0
    %1135 = vmatprep.subr.bf16.mxu0 0
    %1136 = vmatpush1.bf16.msra.mxu0 0
    %1137 = vmatprep.subr.bf16.mxu0 0
    %1138 = vmatpush1.bf16.msra.mxu0 0
    %1139 = vmatprep.subr.bf16.mxu0 0
    %1140 = vmatpush1.bf16.msra.mxu0 0
    %1141 = vmatprep.subr.bf16.mxu0 0
    %1142 = vmatpush1.bf16.msra.mxu0 0
    %1143 = vmatprep.mubr.bf16.mxu0 0
    %1144 = vmatmul.mubr.bf16.gmra.mrb[0].mxu0 %v1068
    %v1145 = vpop.f32.mrb[0].mxu0
    %v1146 = vadd.f32 0.0, %v1145
    %v1147 = vpop.f32.mrb[0].mxu0
    %v1148 = vadd.f32 0.0, %v1147
    %v1149 = vpop.f32.mrb[0].mxu0
    %v1150 = vpop.f32.mrb[0].mxu0
    %1151 = vdwg.mxu0
    %v1156 = vrot.slane %v1105, 1
    %v1157 = vrot.slane %v1107, 1
    %v1158 = vrot.slane %v1146, 1
    %v1159 = vrot.slane %v1148, 1
    %v1164 = vadd.f32 %v46, %v1156
    %v1165 = vadd.f32 %v47, %v1157
    %v1166 = vadd.f32 %v48, %v1158
    %v1167 = vadd.f32 %v49, %v1159
    %v1168 = vtanh.pop %v1164
    %v1169 = vtanh.pop %v1165
    %v1170 = vtanh.pop %v1166
    %v1171 = vtanh.pop %v1167
    %v1172 = vmul.f32 %v1168, 0.5
    %v1173 = vmul.f32 %v1169, 0.5
    %v1174 = vmul.f32 %v1170, 0.5
    %v1175 = vadd.f32 %v1172, 0.5
    %v1176 = vadd.f32 %v1173, 0.5
    %v1177 = vadd.f32 %v1174, 0.5
    %v1179 = vrot.slane %v1063, 7
    %v1181 = vmul.f32 %v1176, %v1179
    %v1182 = vmul.f32 %v1175, %v1171
    %v1183 = vadd.f32 %v1181, %v1182
    %v1184 = vtanh.pop %v1183
    %v1185 = vmul.f32 %v1177, %v1184
    %1186 = vst [vmem:[#allocation2 - $0x7] sm:$0x80] %v1185
    %1187 = vst [vmem:[#allocation3 - $0x7] sm:$0x80] %v1183
    // Predicated region
    $region26: #{tpu_custom_call.1} parent=1 // pred_check
      %p1188 = pneg %p35
    $region27: #{tpu_custom_call.1} parent=1 // pred_check_branch
      %1190 = sbr.rel (%p1188) target = $region29
    $region28: #{tpu_custom_call.1} parent=1 // pred_region
      %v1191 = vld [vmem:[%s2] sm:$0xff]
      %v1192 = vld [vmem:[%s2 + $0x8] sm:$0xff]
      %v1193 = vld [vmem:[%s2 + $0x10] sm:$0xff]
      %v1194 = vld [vmem:[%s2 + $0x18] sm:$0xff]
      %v1195 = vld [vmem:[%s2 + $0x20] sm:$0xff]
      %v1196 = vld [vmem:[%s2 + $0x28] sm:$0xff]
      %v1197 = vld [vmem:[%s2 + $0x30] sm:$0xff]
      %v1198 = vld [vmem:[%s2 + $0x38] sm:$0xff]
      %v1199 = vld [vmem:[%s2 + $0x40] sm:$0xff]
      %v1200 = vld [vmem:[%s2 + $0x48] sm:$0xff]
      %v1201 = vld [vmem:[%s2 + $0x50] sm:$0xff]
      %v1202 = vld [vmem:[%s2 + $0x58] sm:$0xff]
      %v1203 = vld [vmem:[%s2 + $0x60] sm:$0xff]
      %v1204 = vld [vmem:[%s2 + $0x68] sm:$0xff]
      %v1205 = vld [vmem:[%s2 + $0x70] sm:$0xff]
      %v1206 = vld [vmem:[%s2 + $0x78] sm:$0xff]
      %v1207 = vld [vmem:[#allocation4] sm:$0x1]
      %v1209 = vrot.slane %v1185, 7
      %1211 = vmatprep.subr.mxu0 0.0
      %1212 = vmatpush1.msra.mxu0 %v1191
      %1213 = vmatprep.subr.mxu0 0.0
      %1214 = vmatpush1.msra.mxu0 %v1192
      %1215 = vmatprep.subr.mxu0 0.0
      %1216 = vmatpush1.msra.mxu0 %v1193
      %1217 = vmatprep.subr.mxu0 0.0
      %1218 = vmatpush1.msra.mxu0 %v1194
      %1219 = vmatprep.subr.mxu0 0.0
      %1220 = vmatpush1.msra.mxu0 %v1195
      %1221 = vmatprep.subr.mxu0 0.0
      %1222 = vmatpush1.msra.mxu0 %v1196
      %1223 = vmatprep.subr.mxu0 0.0
      %1224 = vmatpush1.msra.mxu0 %v1197
      %1225 = vmatprep.subr.mxu0 0.0
      %1226 = vmatpush1.msra.mxu0 %v1198
      %1227 = vmatprep.subr.mxu0 0.0
      %1228 = vmatpush1.msra.mxu0 %v1199
      %1229 = vmatprep.subr.mxu0 0.0
      %1230 = vmatpush1.msra.mxu0 %v1200
      %1231 = vmatprep.subr.mxu0 0.0
      %1232 = vmatpush1.msra.mxu0 %v1201
      %1233 = vmatprep.subr.mxu0 0.0
      %1234 = vmatpush1.msra.mxu0 %v1202
      %1235 = vmatprep.subr.mxu0 0.0
      %1236 = vmatpush1.msra.mxu0 %v1203
      %1237 = vmatprep.subr.mxu0 0.0
      %1238 = vmatpush1.msra.mxu0 %v1204
      %1239 = vmatprep.subr.mxu0 0.0
      %1240 = vmatpush1.msra.mxu0 %v1205
      %1241 = vmatprep.subr.mxu0 0.0
      %1242 = vmatpush1.msra.mxu0 %v1206
      %1243 = vmatprep.subr.mxu0 0.0
      %1244 = vmatpush1.msra.mxu0 0.0
      %1245 = vmatprep.subr.mxu0 0.0
      %1246 = vmatpush1.msra.mxu0 0.0
      %1247 = vmatprep.subr.mxu0 0.0
      %1248 = vmatpush1.msra.mxu0 0.0
      %1249 = vmatprep.subr.mxu0 0.0
      %1250 = vmatpush1.msra.mxu0 0.0
      %1251 = vmatprep.subr.mxu0 0.0
      %1252 = vmatpush1.msra.mxu0 0.0
      %1253 = vmatprep.subr.mxu0 0.0
      %1254 = vmatpush1.msra.mxu0 0.0
      %1255 = vmatprep.subr.mxu0 0.0
      %1256 = vmatpush1.msra.mxu0 0.0
      %1257 = vmatprep.subr.mxu0 0.0
      %1258 = vmatpush1.msra.mxu0 0.0
      %1259 = vmatprep.subr.mxu0 0.0
      %1260 = vmatpush1.msra.mxu0 0.0
      %1261 = vmatprep.subr.mxu0 0.0
      %1262 = vmatpush1.msra.mxu0 0.0
      %1263 = vmatprep.subr.mxu0 0.0
      %1264 = vmatpush1.msra.mxu0 0.0
      %1265 = vmatprep.subr.mxu0 0.0
      %1266 = vmatpush1.msra.mxu0 0.0
      %1267 = vmatprep.subr.mxu0 0.0
      %1268 = vmatpush1.msra.mxu0 0.0
      %1269 = vmatprep.subr.mxu0 0.0
      %1270 = vmatpush1.msra.mxu0 0.0
      %1271 = vmatprep.subr.mxu0 0.0
      %1272 = vmatpush1.msra.mxu0 0.0
      %1273 = vmatprep.subr.mxu0 0.0
      %1274 = vmatpush1.msra.mxu0 0.0
      %1275 = vmatprep.mubr.f32.mxu0 0.0
      %1276 = vmatmul.mubr.f32.gmra.mrb[0].mxu0 %v1209
      %v1277 = vpop.f32.mrb[0].mxu0
      %v1278 = vadd.f32 %v1207, %v1277
      %v1279 = vpop.f32.mrb[0].mxu0
      %1280 = vdwg.mxu0
      %vm1281 = vcmask 0
      %1282 = vst.msk [vmem:[#allocation8] sm:$0x1] %vm1281, %v1278
    $region29: #{tpu_custom_call.1} parent=1 // pred_fallthru
      _
    // Predicated region
    $region30: #{tpu_custom_call.1} parent=1 // pred_check
      _
    $region31: #{tpu_custom_call.1} parent=1 // pred_check_branch
      %1284 = sbr.rel (0) target = $region33
    $region32: #{tpu_custom_call.1} parent=1 // pred_region
      %s1286 = ssub.s32 16, 16
      %1287 = vsyncadd [#allocation7], %s1286
      %s1289 = sshll.u32 [#allocation8], 4
      %s1290 = int_to_ptr.vmem [resolvable:$true] %s1289
      %1292 = dma.vmem_to_hbm [thread:$0]  %s1290, 16, %s4, [#allocation7]
    $region33: #{tpu_custom_call.1} parent=1 // pred_fallthru
      _
    // Predicated region
    $region34: #{tpu_custom_call.1} parent=1 // pred_check
      _
    $region35: #{tpu_custom_call.1} parent=1 // pred_check_branch
      %1294 = sbr.rel (0) target = $region37
    $region36: #{tpu_custom_call.1} parent=1 // pred_region
      %1295 = dma.done [#allocation7], 16
    $region37: #{tpu_custom_call.1} parent=1 // pred_fallthru
      _
    %1296 = vsyncpa [#allocation6], 1
    %1297 = vsyncpa [#allocation7], 1

</llo_original>
